<compile_context>
chip_gen: v7x
topology: tpu7x:2x2x1
jax: 0.10.0
libtpu: 0.0.40
codegen_flags: <defaults>
</compile_context>

<pallas_src>
import functools

import jax
import jax.numpy as jnp
from jax.experimental import pallas as pl
from jax.experimental.pallas import tpu as pltpu


# ---------------------------------------------------------------------------
# Fused kernel: per-row packed conv matmul -> shift/accumulate + ReLU + max-pool -> FC
# ---------------------------------------------------------------------------
def _textcnn_kernel(x_ref, w_ref, b_ref, fcw_ref, fcb_ref, o_ref, y_ref, *,
                    kernel_sizes, pad, kernel_num):
    # x_ref:   (L, D, TB)        time-major, batch-on-lanes input tile
    # w_ref:   (sum_f*Co, D)     packed conv taps for ALL branches (branch-major)
    # b_ref:   (nb*Co, 1)        conv bias column
    # fcw_ref: (C, nb*Co)        fc weight (native PyTorch layout)
    # fcb_ref: (C, 1)            fc bias column
    # o_ref:   (C, TB)           logits (lane-dense)
    # y_ref:   (L, sum_f*Co, TB) VMEM scratch for per-row packed conv products
    L, D, TB = x_ref.shape
    Co = kernel_num
    C = o_ref.shape[0]
    t_full = L + 2 * pad

    # ---- Phase 1: one MXU matmul per input time row; result goes straight to
    # VMEM scratch so only the current row / current result stay live in vregs.
    w_all = w_ref[...]                                   # (96, D), resident
    for t in range(L):
        y_ref[t] = jnp.dot(w_all, x_ref[t], preferred_element_type=jnp.float32)

    # ---- Phase 2: conv shift/accumulate + bias + ReLU + time max-pool, per branch,
    # all on (Co, TB) lane-dense slabs. Out-of-range taps == implicit zero padding.
    pooled = []
    row = 0
    for bi, f in enumerate(kernel_sizes):
        # Hoisted bias broadcast (JAX does not CSE broadcast_in_dim inside loops).
        bias = jnp.broadcast_to(b_ref[bi * Co:(bi + 1) * Co, :], (Co, TB))
        m = None
        for t in range(t_full - f + 1):
            acc = bias
            for k in range(f):
                src = t + k - pad            # static; out of range == zero-pad row
                if 0 <= src < L:
                    acc = acc + y_ref[src, row + k * Co: row + (k + 1) * Co, :]
            a = jnp.maximum(acc, 0.0)                      # bias already in acc; ReLU
            m = a if m is None else jnp.maximum(m, a)      # running time max-pool
        pooled.append(m)                                    # (Co, TB)
        row += f * Co

    # Dropout at inference time is the identity (between pooling and FC).
    # TODO(synk): training-mode dropout (random mask + 1/(1-p) scale) not applied.

    # ---- FC: sublane concat (aligned (8, TB) tiles -> free) + one MXU matmul,
    # logits stay (C, TB) lane-dense.
    feats = jnp.concatenate(pooled, axis=0)                # (nb*Co, TB)
    logits = jnp.dot(fcw_ref[...], feats, preferred_element_type=jnp.float32)
    logits = logits + jnp.broadcast_to(fcb_ref[...], (C, TB))
    o_ref[...] = logits.astype(o_ref.dtype)


@functools.partial(jax.jit,
                   static_argnames=("kernel_sizes", "pad", "kernel_num",
                                    "block_b", "compute_dtype"))
def textcnn_forward(x_ldb, w_all, b_col, fc_w, fc_b_col, *,
                    kernel_sizes, pad, kernel_num, block_b, compute_dtype):
    """x_ldb: [L, D, B] batch-on-lanes stacked inputs -> logits [C, B]."""
    L, D, B = x_ldb.shape
    C = fc_w.shape[0]
    SFCo = sum(kernel_sizes) * kernel_num

    Bp = ((B + block_b - 1) // block_b) * block_b
    if Bp != B:
        x_ldb = jnp.pad(x_ldb, ((0, 0), (0, 0), (0, Bp - B)))   # lane (batch) pad only
    if jnp.dtype(compute_dtype) != jnp.dtype(jnp.float32):
        # bf16 MXU inputs (all generations); accumulation stays f32 in the kernel.
        x_ldb = x_ldb.astype(compute_dtype)
        w_all = w_all.astype(compute_dtype)

    kern = functools.partial(_textcnn_kernel, kernel_sizes=tuple(kernel_sizes),
                             pad=pad, kernel_num=kernel_num)
    out = pl.pallas_call(
        kern,
        out_shape=jax.ShapeDtypeStruct((C, Bp), jnp.float32),
        grid_spec=pltpu.PrefetchScalarGridSpec(
            num_scalar_prefetch=0,
            grid=(Bp // block_b,),
            in_specs=[
                pl.BlockSpec((L, D, block_b), lambda bi: (0, 0, bi)),
                pl.BlockSpec(w_all.shape, lambda bi: (0, 0)),      # resident weights
                pl.BlockSpec(b_col.shape, lambda bi: (0, 0)),
                pl.BlockSpec(fc_w.shape, lambda bi: (0, 0)),
                pl.BlockSpec(fc_b_col.shape, lambda bi: (0, 0)),
            ],
            out_specs=pl.BlockSpec((C, block_b), lambda bi: (0, bi)),
            scratch_shapes=[pltpu.VMEM((L, SFCo, block_b), jnp.float32)],
        ),
        compiler_params=pltpu.CompilerParams(
            dimension_semantics=("parallel",)),   # batch tiles -> v7x's two TCs
    )(x_ldb, w_all, b_col, fc_w, fc_b_col)
    return out[:, :B]


# ---------------------------------------------------------------------------
# Model wrapper
# ---------------------------------------------------------------------------
class TextCnnPallas:
    LANE = 128

    def __init__(self, key, *, kernel_num=8, kernel_sizes=(3, 4, 5),
                 embed_dim=50, class_num=2, pad=2, block_b=None,
                 compute_dtype=jnp.float32):
        self.embed_dim = embed_dim
        self.kernel_sizes = tuple(kernel_sizes)
        self.kernel_num = kernel_num
        self.class_num = class_num
        self.pad = pad
        self.block_b = block_b
        self.compute_dtype = compute_dtype

        keys = jax.random.split(key, 2 * len(self.kernel_sizes) + 2)
        # PyTorch-layout parameters (kept for the pure-JAX reference).
        self.conv_w, self.conv_b = [], []     # [Co, Ci=1, f, D] / [Co]
        for i, f in enumerate(self.kernel_sizes):
            self.conv_w.append(0.1 * jax.random.normal(
                keys[2 * i], (kernel_num, 1, f, embed_dim), jnp.float32))
            self.conv_b.append(0.1 * jax.random.normal(
                keys[2 * i + 1], (kernel_num,), jnp.float32))
        F_in = kernel_num * len(self.kernel_sizes)
        self.fc_w = 0.1 * jax.random.normal(keys[-2], (class_num, F_in), jnp.float32)
        self.fc_b = 0.1 * jax.random.normal(keys[-1], (class_num,), jnp.float32)

        # Kernel-side layouts precomputed ONCE (no per-forward transposes).
        rows = []
        for w in self.conv_w:                     # branch-major, then tap, then Co
            f = w.shape[2]
            for k in range(f):
                rows.append(w[:, 0, k, :])        # (Co, D)
        self.w_all = jnp.concatenate(rows, axis=0)                 # (sum_f*Co, D)
        self.b_col = jnp.concatenate(self.conv_b).reshape(-1, 1)   # (nb*Co, 1)
        self.fc_b_col = self.fc_b.reshape(-1, 1)                   # (C, 1)
        # fc_w stays in native (C, nb*Co) layout: logits = fc_w @ feats(Co*nb, TB).

    def _pick_block_b(self, B):
        LANE = self.LANE
        n_groups = -(-B // LANE)                  # batch in 128-lane groups
        if self.block_b is not None:
            return max(LANE, ((self.block_b + LANE - 1) // LANE) * LANE)
        if n_groups <= 1:
            return LANE
        block_b = 256
        # v7x: keep >= 2 grid steps when the batch spans >= 2 lane groups.
        block_b = min(block_b, ((n_groups + 1) // 2) * LANE)
        return block_b

    def forward(self, xs, compute_dtype=None):
        # xs: list of [L, embed_dim] inputs (same L assumed so they batch cleanly).
        # TODO(synk): variable-length inputs would need per-element length masking
        #             before the time max-pool.
        compute_dtype = compute_dtype or self.compute_dtype
        B = len(xs)
        x = jnp.stack(xs, axis=-1)                # [L, D, B] batch-on-lanes
        block_b = self._pick_block_b(B)

        logits = textcnn_forward(
            x, self.w_all, self.b_col, self.fc_w, self.fc_b_col,
            kernel_sizes=self.kernel_sizes, pad=self.pad,
            kernel_num=self.kernel_num, block_b=block_b,
            compute_dtype=compute_dtype)          # (C, B)
        return [logits[:, i] for i in range(B)]


# ---------------------------------------------------------------------------
# Pure-JAX reference (mirrors the PyTorch forward) for verification
# ---------------------------------------------------------------------------
def ref_forward(model, xs):
    outs = []
    hi = jax.lax.Precision.HIGHEST
    for x in xs:
        xp = jnp.pad(x, ((2, 2), (0, 0)))
        feats = []
        for f, w, b in zip(model.kernel_sizes, model.conv_w, model.conv_b):
            t_out = xp.shape[0] - f + 1
            wins = jnp.stack([xp[k:k + t_out] for k in range(f)], axis=0)  # [f,T,D]
            conv = jnp.einsum("ktd,ckd->tc", wins, w[:, 0], precision=hi) + b
            feats.append(jnp.max(jax.nn.relu(conv), axis=0))
        feat = jnp.concatenate(feats)
        outs.append(feat @ model.fc_w.T + model.fc_b)
    return outs


if __name__ == "__main__":
    key = jax.random.PRNGKey(0)
    k_model, k_x = jax.random.split(key)

    B, L, D = 16, 8, 50
    model = TextCnnPallas(k_model, kernel_num=8, kernel_sizes=(3, 4, 5), embed_dim=D)

    xk = jax.random.split(k_x, B)
    xs = [jax.random.normal(xk[i], (L, D), jnp.float32) for i in range(B)]

    # f32 path.
    out = model.forward(xs)
    out = [jax.block_until_ready(o) for o in out]
    ref = ref_forward(model, xs)
    for o, r in zip(out, ref):
        assert o.shape == (2,), o.shape
        assert jnp.allclose(o, r, atol=1e-3, rtol=1e-3), (o, r)

    # Small-batch path (exercises lane/batch padding up to one tile).
    out_small = [jax.block_until_ready(o) for o in model.forward(xs[:2])]
    for o, r in zip(out_small, ref[:2]):
        assert o.shape == (2,), o.shape
        assert jnp.allclose(o, r, atol=1e-3, rtol=1e-3), (o, r)

    # bf16 MXU-input path (all generations); f32 accumulation, looser tolerance.
    out_bf16 = [jax.block_until_ready(o)
                for o in model.forward(xs, compute_dtype=jnp.bfloat16)]
    for o, r in zip(out_bf16, ref):
        assert jnp.allclose(o, r, atol=5e-2, rtol=5e-2), (o, r)

    print("KERNEL_OK")
</pallas_src>

<mosaic_0001>
module attributes {stable_mosaic.version = 11 : i64} {
  func.func @_textcnn_kernel(%arg0: i32, %arg1: memref<8x50x128xf32, #tpu.memory_space<vmem>>, %arg2: memref<96x50xf32, #tpu.memory_space<vmem>>, %arg3: memref<24x1xf32, #tpu.memory_space<vmem>>, %arg4: memref<2x24xf32, #tpu.memory_space<vmem>>, %arg5: memref<2x1xf32, #tpu.memory_space<vmem>>, %arg6: memref<2x128xf32, #tpu.memory_space<vmem>>, %arg7: memref<8x96x128xf32, #tpu.memory_space<vmem>>) attributes {dimension_semantics = [#tpu.dimension_semantics<parallel>], iteration_bounds = array<i64: 1>, scalar_prefetch = 0 : i64, scratch_operands = 1 : i64, tpu.core_type = #tpu.core_type<tc>, window_params = [{transform_indices = @transform_0, window_bounds = array<i64: 8, 50, 128>}, {pipeline_mode = #tpu.pipeline_mode<synchronous>, transform_indices = @transform_1, window_bounds = array<i64: 96, 50>}, {pipeline_mode = #tpu.pipeline_mode<synchronous>, transform_indices = @transform_2, window_bounds = array<i64: 24, 1>}, {pipeline_mode = #tpu.pipeline_mode<synchronous>, transform_indices = @transform_3, window_bounds = array<i64: 2, 24>}, {pipeline_mode = #tpu.pipeline_mode<synchronous>, transform_indices = @transform_4, window_bounds = array<i64: 2, 1>}, {transform_indices = @transform_5, window_bounds = array<i64: 2, 128>}]} {
    %c0 = arith.constant 0 : index
    %c0_0 = arith.constant 0 : index
    %0 = vector.load %arg2[%c0, %c0_0] : memref<96x50xf32, #tpu.memory_space<vmem>>, vector<96x50xf32>
    %c0_1 = arith.constant 0 : index
    %c0_2 = arith.constant 0 : index
    %c0_3 = arith.constant 0 : index
    %1 = vector.load %arg1[%c0_1, %c0_2, %c0_3] : memref<8x50x128xf32, #tpu.memory_space<vmem>>, vector<1x50x128xf32>
    %2 = vector.shape_cast %1 : vector<1x50x128xf32> to vector<50x128xf32>
    %cst = arith.constant dense<0.000000e+00> : vector<96x128xf32>
    %3 = tpu.matmul %0, %2, %cst {dimension_numbers = #tpu.dot_dimension_numbers<[1], [0], [0], [1], [0, 0, 1, 1], [], []>} : vector<96x50xf32>, vector<50x128xf32>, vector<96x128xf32> -> vector<96x128xf32>
    %c0_4 = arith.constant 0 : index
    %c0_5 = arith.constant 0 : index
    %c0_6 = arith.constant 0 : index
    %4 = vector.load %arg7[%c0_4, %c0_5, %c0_6] : memref<8x96x128xf32, #tpu.memory_space<vmem>>, vector<1x96x128xf32>
    %5 = vector.shape_cast %4 : vector<1x96x128xf32> to vector<96x128xf32>
    %6 = vector.shape_cast %3 : vector<96x128xf32> to vector<1x96x128xf32>
    tpu.vector_store %arg7[%c0_4, %c0_5, %c0_6], %6 {strides = array<i32>} : memref<8x96x128xf32, #tpu.memory_space<vmem>>, vector<1x96x128xf32>,
    %c1 = arith.constant 1 : index
    %c0_7 = arith.constant 0 : index
    %c0_8 = arith.constant 0 : index
    %7 = vector.load %arg1[%c1, %c0_7, %c0_8] : memref<8x50x128xf32, #tpu.memory_space<vmem>>, vector<1x50x128xf32>
    %8 = vector.shape_cast %7 : vector<1x50x128xf32> to vector<50x128xf32>
    %cst_9 = arith.constant dense<0.000000e+00> : vector<96x128xf32>
    %9 = tpu.matmul %0, %8, %cst_9 {dimension_numbers = #tpu.dot_dimension_numbers<[1], [0], [0], [1], [0, 0, 1, 1], [], []>} : vector<96x50xf32>, vector<50x128xf32>, vector<96x128xf32> -> vector<96x128xf32>
    %c1_10 = arith.constant 1 : index
    %c0_11 = arith.constant 0 : index
    %c0_12 = arith.constant 0 : index
    %10 = vector.load %arg7[%c1_10, %c0_11, %c0_12] : memref<8x96x128xf32, #tpu.memory_space<vmem>>, vector<1x96x128xf32>
    %11 = vector.shape_cast %10 : vector<1x96x128xf32> to vector<96x128xf32>
    %12 = vector.shape_cast %9 : vector<96x128xf32> to vector<1x96x128xf32>
    tpu.vector_store %arg7[%c1_10, %c0_11, %c0_12], %12 {strides = array<i32>} : memref<8x96x128xf32, #tpu.memory_space<vmem>>, vector<1x96x128xf32>,
    %c2 = arith.constant 2 : index
    %c0_13 = arith.constant 0 : index
    %c0_14 = arith.constant 0 : index
    %13 = vector.load %arg1[%c2, %c0_13, %c0_14] : memref<8x50x128xf32, #tpu.memory_space<vmem>>, vector<1x50x128xf32>
    %14 = vector.shape_cast %13 : vector<1x50x128xf32> to vector<50x128xf32>
    %cst_15 = arith.constant dense<0.000000e+00> : vector<96x128xf32>
    %15 = tpu.matmul %0, %14, %cst_15 {dimension_numbers = #tpu.dot_dimension_numbers<[1], [0], [0], [1], [0, 0, 1, 1], [], []>} : vector<96x50xf32>, vector<50x128xf32>, vector<96x128xf32> -> vector<96x128xf32>
    %c2_16 = arith.constant 2 : index
    %c0_17 = arith.constant 0 : index
    %c0_18 = arith.constant 0 : index
    %16 = vector.load %arg7[%c2_16, %c0_17, %c0_18] : memref<8x96x128xf32, #tpu.memory_space<vmem>>, vector<1x96x128xf32>
    %17 = vector.shape_cast %16 : vector<1x96x128xf32> to vector<96x128xf32>
    %18 = vector.shape_cast %15 : vector<96x128xf32> to vector<1x96x128xf32>
    tpu.vector_store %arg7[%c2_16, %c0_17, %c0_18], %18 {strides = array<i32>} : memref<8x96x128xf32, #tpu.memory_space<vmem>>, vector<1x96x128xf32>,
    %c3 = arith.constant 3 : index
    %c0_19 = arith.constant 0 : index
    %c0_20 = arith.constant 0 : index
    %19 = vector.load %arg1[%c3, %c0_19, %c0_20] : memref<8x50x128xf32, #tpu.memory_space<vmem>>, vector<1x50x128xf32>
    %20 = vector.shape_cast %19 : vector<1x50x128xf32> to vector<50x128xf32>
    %cst_21 = arith.constant dense<0.000000e+00> : vector<96x128xf32>
    %21 = tpu.matmul %0, %20, %cst_21 {dimension_numbers = #tpu.dot_dimension_numbers<[1], [0], [0], [1], [0, 0, 1, 1], [], []>} : vector<96x50xf32>, vector<50x128xf32>, vector<96x128xf32> -> vector<96x128xf32>
    %c3_22 = arith.constant 3 : index
    %c0_23 = arith.constant 0 : index
    %c0_24 = arith.constant 0 : index
    %22 = vector.load %arg7[%c3_22, %c0_23, %c0_24] : memref<8x96x128xf32, #tpu.memory_space<vmem>>, vector<1x96x128xf32>
    %23 = vector.shape_cast %22 : vector<1x96x128xf32> to vector<96x128xf32>
    %24 = vector.shape_cast %21 : vector<96x128xf32> to vector<1x96x128xf32>
    tpu.vector_store %arg7[%c3_22, %c0_23, %c0_24], %24 {strides = array<i32>} : memref<8x96x128xf32, #tpu.memory_space<vmem>>, vector<1x96x128xf32>,
    %c4 = arith.constant 4 : index
    %c0_25 = arith.constant 0 : index
    %c0_26 = arith.constant 0 : index
    %25 = vector.load %arg1[%c4, %c0_25, %c0_26] : memref<8x50x128xf32, #tpu.memory_space<vmem>>, vector<1x50x128xf32>
    %26 = vector.shape_cast %25 : vector<1x50x128xf32> to vector<50x128xf32>
    %cst_27 = arith.constant dense<0.000000e+00> : vector<96x128xf32>
    %27 = tpu.matmul %0, %26, %cst_27 {dimension_numbers = #tpu.dot_dimension_numbers<[1], [0], [0], [1], [0, 0, 1, 1], [], []>} : vector<96x50xf32>, vector<50x128xf32>, vector<96x128xf32> -> vector<96x128xf32>
    %c4_28 = arith.constant 4 : index
    %c0_29 = arith.constant 0 : index
    %c0_30 = arith.constant 0 : index
    %28 = vector.load %arg7[%c4_28, %c0_29, %c0_30] : memref<8x96x128xf32, #tpu.memory_space<vmem>>, vector<1x96x128xf32>
    %29 = vector.shape_cast %28 : vector<1x96x128xf32> to vector<96x128xf32>
    %30 = vector.shape_cast %27 : vector<96x128xf32> to vector<1x96x128xf32>
    tpu.vector_store %arg7[%c4_28, %c0_29, %c0_30], %30 {strides = array<i32>} : memref<8x96x128xf32, #tpu.memory_space<vmem>>, vector<1x96x128xf32>,
    %c5 = arith.constant 5 : index
    %c0_31 = arith.constant 0 : index
    %c0_32 = arith.constant 0 : index
    %31 = vector.load %arg1[%c5, %c0_31, %c0_32] : memref<8x50x128xf32, #tpu.memory_space<vmem>>, vector<1x50x128xf32>
    %32 = vector.shape_cast %31 : vector<1x50x128xf32> to vector<50x128xf32>
    %cst_33 = arith.constant dense<0.000000e+00> : vector<96x128xf32>
    %33 = tpu.matmul %0, %32, %cst_33 {dimension_numbers = #tpu.dot_dimension_numbers<[1], [0], [0], [1], [0, 0, 1, 1], [], []>} : vector<96x50xf32>, vector<50x128xf32>, vector<96x128xf32> -> vector<96x128xf32>
    %c5_34 = arith.constant 5 : index
    %c0_35 = arith.constant 0 : index
    %c0_36 = arith.constant 0 : index
    %34 = vector.load %arg7[%c5_34, %c0_35, %c0_36] : memref<8x96x128xf32, #tpu.memory_space<vmem>>, vector<1x96x128xf32>
    %35 = vector.shape_cast %34 : vector<1x96x128xf32> to vector<96x128xf32>
    %36 = vector.shape_cast %33 : vector<96x128xf32> to vector<1x96x128xf32>
    tpu.vector_store %arg7[%c5_34, %c0_35, %c0_36], %36 {strides = array<i32>} : memref<8x96x128xf32, #tpu.memory_space<vmem>>, vector<1x96x128xf32>,
    %c6 = arith.constant 6 : index
    %c0_37 = arith.constant 0 : index
    %c0_38 = arith.constant 0 : index
    %37 = vector.load %arg1[%c6, %c0_37, %c0_38] : memref<8x50x128xf32, #tpu.memory_space<vmem>>, vector<1x50x128xf32>
    %38 = vector.shape_cast %37 : vector<1x50x128xf32> to vector<50x128xf32>
    %cst_39 = arith.constant dense<0.000000e+00> : vector<96x128xf32>
    %39 = tpu.matmul %0, %38, %cst_39 {dimension_numbers = #tpu.dot_dimension_numbers<[1], [0], [0], [1], [0, 0, 1, 1], [], []>} : vector<96x50xf32>, vector<50x128xf32>, vector<96x128xf32> -> vector<96x128xf32>
    %c6_40 = arith.constant 6 : index
    %c0_41 = arith.constant 0 : index
    %c0_42 = arith.constant 0 : index
    %40 = vector.load %arg7[%c6_40, %c0_41, %c0_42] : memref<8x96x128xf32, #tpu.memory_space<vmem>>, vector<1x96x128xf32>
    %41 = vector.shape_cast %40 : vector<1x96x128xf32> to vector<96x128xf32>
    %42 = vector.shape_cast %39 : vector<96x128xf32> to vector<1x96x128xf32>
    tpu.vector_store %arg7[%c6_40, %c0_41, %c0_42], %42 {strides = array<i32>} : memref<8x96x128xf32, #tpu.memory_space<vmem>>, vector<1x96x128xf32>,
    %c7 = arith.constant 7 : index
    %c0_43 = arith.constant 0 : index
    %c0_44 = arith.constant 0 : index
    %43 = vector.load %arg1[%c7, %c0_43, %c0_44] : memref<8x50x128xf32, #tpu.memory_space<vmem>>, vector<1x50x128xf32>
    %44 = vector.shape_cast %43 : vector<1x50x128xf32> to vector<50x128xf32>
    %cst_45 = arith.constant dense<0.000000e+00> : vector<96x128xf32>
    %45 = tpu.matmul %0, %44, %cst_45 {dimension_numbers = #tpu.dot_dimension_numbers<[1], [0], [0], [1], [0, 0, 1, 1], [], []>} : vector<96x50xf32>, vector<50x128xf32>, vector<96x128xf32> -> vector<96x128xf32>
    %c7_46 = arith.constant 7 : index
    %c0_47 = arith.constant 0 : index
    %c0_48 = arith.constant 0 : index
    %46 = vector.load %arg7[%c7_46, %c0_47, %c0_48] : memref<8x96x128xf32, #tpu.memory_space<vmem>>, vector<1x96x128xf32>
    %47 = vector.shape_cast %46 : vector<1x96x128xf32> to vector<96x128xf32>
    %48 = vector.shape_cast %45 : vector<96x128xf32> to vector<1x96x128xf32>
    tpu.vector_store %arg7[%c7_46, %c0_47, %c0_48], %48 {strides = array<i32>} : memref<8x96x128xf32, #tpu.memory_space<vmem>>, vector<1x96x128xf32>,
    %c0_49 = arith.constant 0 : index
    %c0_50 = arith.constant 0 : index
    %49 = vector.load %arg3[%c0_49, %c0_50] : memref<24x1xf32, #tpu.memory_space<vmem>>, vector<8x1xf32>
    %50 = vector.shape_cast %49 : vector<8x1xf32> to vector<8x1xf32>
    %51 = vector.broadcast %50 : vector<8x1xf32> to vector<8x128xf32>
    %c0_51 = arith.constant 0 : index
    %c16 = arith.constant 16 : index
    %c0_52 = arith.constant 0 : index
    %52 = vector.load %arg7[%c0_51, %c16, %c0_52] : memref<8x96x128xf32, #tpu.memory_space<vmem>>, vector<1x8x128xf32>
    %53 = vector.shape_cast %52 : vector<1x8x128xf32> to vector<8x128xf32>
    %54 = arith.addf %51, %53 : vector<8x128xf32>
    %cst_53 = arith.constant 0.000000e+00 : f32
    %55 = vector.broadcast %cst_53 : f32 to vector<8x128xf32>
    %56 = arith.maximumf %54, %55 : vector<8x128xf32>
    %c0_54 = arith.constant 0 : index
    %c8 = arith.constant 8 : index
    %c0_55 = arith.constant 0 : index
    %57 = vector.load %arg7[%c0_54, %c8, %c0_55] : memref<8x96x128xf32, #tpu.memory_space<vmem>>, vector<1x8x128xf32>
    %58 = vector.shape_cast %57 : vector<1x8x128xf32> to vector<8x128xf32>
    %59 = arith.addf %51, %58 : vector<8x128xf32>
    %c1_56 = arith.constant 1 : index
    %c16_57 = arith.constant 16 : index
    %c0_58 = arith.constant 0 : index
    %60 = vector.load %arg7[%c1_56, %c16_57, %c0_58] : memref<8x96x128xf32, #tpu.memory_space<vmem>>, vector<1x8x128xf32>
    %61 = vector.shape_cast %60 : vector<1x8x128xf32> to vector<8x128xf32>
    %62 = arith.addf %59, %61 : vector<8x128xf32>
    %cst_59 = arith.constant 0.000000e+00 : f32
    %63 = vector.broadcast %cst_59 : f32 to vector<8x128xf32>
    %64 = arith.maximumf %62, %63 : vector<8x128xf32>
    %65 = arith.maximumf %56, %64 : vector<8x128xf32>
    %c0_60 = arith.constant 0 : index
    %c0_61 = arith.constant 0 : index
    %c0_62 = arith.constant 0 : index
    %66 = vector.load %arg7[%c0_60, %c0_61, %c0_62] : memref<8x96x128xf32, #tpu.memory_space<vmem>>, vector<1x8x128xf32>
    %67 = vector.shape_cast %66 : vector<1x8x128xf32> to vector<8x128xf32>
    %68 = arith.addf %51, %67 : vector<8x128xf32>
    %c1_63 = arith.constant 1 : index
    %c8_64 = arith.constant 8 : index
    %c0_65 = arith.constant 0 : index
    %69 = vector.load %arg7[%c1_63, %c8_64, %c0_65] : memref<8x96x128xf32, #tpu.memory_space<vmem>>, vector<1x8x128xf32>
    %70 = vector.shape_cast %69 : vector<1x8x128xf32> to vector<8x128xf32>
    %71 = arith.addf %68, %70 : vector<8x128xf32>
    %c2_66 = arith.constant 2 : index
    %c16_67 = arith.constant 16 : index
    %c0_68 = arith.constant 0 : index
    %72 = vector.load %arg7[%c2_66, %c16_67, %c0_68] : memref<8x96x128xf32, #tpu.memory_space<vmem>>, vector<1x8x128xf32>
    %73 = vector.shape_cast %72 : vector<1x8x128xf32> to vector<8x128xf32>
    %74 = arith.addf %71, %73 : vector<8x128xf32>
    %cst_69 = arith.constant 0.000000e+00 : f32
    %75 = vector.broadcast %cst_69 : f32 to vector<8x128xf32>
    %76 = arith.maximumf %74, %75 : vector<8x128xf32>
    %77 = arith.maximumf %65, %76 : vector<8x128xf32>
    %c1_70 = arith.constant 1 : index
    %c0_71 = arith.constant 0 : index
    %c0_72 = arith.constant 0 : index
    %78 = vector.load %arg7[%c1_70, %c0_71, %c0_72] : memref<8x96x128xf32, #tpu.memory_space<vmem>>, vector<1x8x128xf32>
    %79 = vector.shape_cast %78 : vector<1x8x128xf32> to vector<8x128xf32>
    %80 = arith.addf %51, %79 : vector<8x128xf32>
    %c2_73 = arith.constant 2 : index
    %c8_74 = arith.constant 8 : index
    %c0_75 = arith.constant 0 : index
    %81 = vector.load %arg7[%c2_73, %c8_74, %c0_75] : memref<8x96x128xf32, #tpu.memory_space<vmem>>, vector<1x8x128xf32>
    %82 = vector.shape_cast %81 : vector<1x8x128xf32> to vector<8x128xf32>
    %83 = arith.addf %80, %82 : vector<8x128xf32>
    %c3_76 = arith.constant 3 : index
    %c16_77 = arith.constant 16 : index
    %c0_78 = arith.constant 0 : index
    %84 = vector.load %arg7[%c3_76, %c16_77, %c0_78] : memref<8x96x128xf32, #tpu.memory_space<vmem>>, vector<1x8x128xf32>
    %85 = vector.shape_cast %84 : vector<1x8x128xf32> to vector<8x128xf32>
    %86 = arith.addf %83, %85 : vector<8x128xf32>
    %cst_79 = arith.constant 0.000000e+00 : f32
    %87 = vector.broadcast %cst_79 : f32 to vector<8x128xf32>
    %88 = arith.maximumf %86, %87 : vector<8x128xf32>
    %89 = arith.maximumf %77, %88 : vector<8x128xf32>
    %c2_80 = arith.constant 2 : index
    %c0_81 = arith.constant 0 : index
    %c0_82 = arith.constant 0 : index
    %90 = vector.load %arg7[%c2_80, %c0_81, %c0_82] : memref<8x96x128xf32, #tpu.memory_space<vmem>>, vector<1x8x128xf32>
    %91 = vector.shape_cast %90 : vector<1x8x128xf32> to vector<8x128xf32>
    %92 = arith.addf %51, %91 : vector<8x128xf32>
    %c3_83 = arith.constant 3 : index
    %c8_84 = arith.constant 8 : index
    %c0_85 = arith.constant 0 : index
    %93 = vector.load %arg7[%c3_83, %c8_84, %c0_85] : memref<8x96x128xf32, #tpu.memory_space<vmem>>, vector<1x8x128xf32>
    %94 = vector.shape_cast %93 : vector<1x8x128xf32> to vector<8x128xf32>
    %95 = arith.addf %92, %94 : vector<8x128xf32>
    %c4_86 = arith.constant 4 : index
    %c16_87 = arith.constant 16 : index
    %c0_88 = arith.constant 0 : index
    %96 = vector.load %arg7[%c4_86, %c16_87, %c0_88] : memref<8x96x128xf32, #tpu.memory_space<vmem>>, vector<1x8x128xf32>
    %97 = vector.shape_cast %96 : vector<1x8x128xf32> to vector<8x128xf32>
    %98 = arith.addf %95, %97 : vector<8x128xf32>
    %cst_89 = arith.constant 0.000000e+00 : f32
    %99 = vector.broadcast %cst_89 : f32 to vector<8x128xf32>
    %100 = arith.maximumf %98, %99 : vector<8x128xf32>
    %101 = arith.maximumf %89, %100 : vector<8x128xf32>
    %c3_90 = arith.constant 3 : index
    %c0_91 = arith.constant 0 : index
    %c0_92 = arith.constant 0 : index
    %102 = vector.load %arg7[%c3_90, %c0_91, %c0_92] : memref<8x96x128xf32, #tpu.memory_space<vmem>>, vector<1x8x128xf32>
    %103 = vector.shape_cast %102 : vector<1x8x128xf32> to vector<8x128xf32>
    %104 = arith.addf %51, %103 : vector<8x128xf32>
    %c4_93 = arith.constant 4 : index
    %c8_94 = arith.constant 8 : index
    %c0_95 = arith.constant 0 : index
    %105 = vector.load %arg7[%c4_93, %c8_94, %c0_95] : memref<8x96x128xf32, #tpu.memory_space<vmem>>, vector<1x8x128xf32>
    %106 = vector.shape_cast %105 : vector<1x8x128xf32> to vector<8x128xf32>
    %107 = arith.addf %104, %106 : vector<8x128xf32>
    %c5_96 = arith.constant 5 : index
    %c16_97 = arith.constant 16 : index
    %c0_98 = arith.constant 0 : index
    %108 = vector.load %arg7[%c5_96, %c16_97, %c0_98] : memref<8x96x128xf32, #tpu.memory_space<vmem>>, vector<1x8x128xf32>
    %109 = vector.shape_cast %108 : vector<1x8x128xf32> to vector<8x128xf32>
    %110 = arith.addf %107, %109 : vector<8x128xf32>
    %cst_99 = arith.constant 0.000000e+00 : f32
    %111 = vector.broadcast %cst_99 : f32 to vector<8x128xf32>
    %112 = arith.maximumf %110, %111 : vector<8x128xf32>
    %113 = arith.maximumf %101, %112 : vector<8x128xf32>
    %c4_100 = arith.constant 4 : index
    %c0_101 = arith.constant 0 : index
    %c0_102 = arith.constant 0 : index
    %114 = vector.load %arg7[%c4_100, %c0_101, %c0_102] : memref<8x96x128xf32, #tpu.memory_space<vmem>>, vector<1x8x128xf32>
    %115 = vector.shape_cast %114 : vector<1x8x128xf32> to vector<8x128xf32>
    %116 = arith.addf %51, %115 : vector<8x128xf32>
    %c5_103 = arith.constant 5 : index
    %c8_104 = arith.constant 8 : index
    %c0_105 = arith.constant 0 : index
    %117 = vector.load %arg7[%c5_103, %c8_104, %c0_105] : memref<8x96x128xf32, #tpu.memory_space<vmem>>, vector<1x8x128xf32>
    %118 = vector.shape_cast %117 : vector<1x8x128xf32> to vector<8x128xf32>
    %119 = arith.addf %116, %118 : vector<8x128xf32>
    %c6_106 = arith.constant 6 : index
    %c16_107 = arith.constant 16 : index
    %c0_108 = arith.constant 0 : index
    %120 = vector.load %arg7[%c6_106, %c16_107, %c0_108] : memref<8x96x128xf32, #tpu.memory_space<vmem>>, vector<1x8x128xf32>
    %121 = vector.shape_cast %120 : vector<1x8x128xf32> to vector<8x128xf32>
    %122 = arith.addf %119, %121 : vector<8x128xf32>
    %cst_109 = arith.constant 0.000000e+00 : f32
    %123 = vector.broadcast %cst_109 : f32 to vector<8x128xf32>
    %124 = arith.maximumf %122, %123 : vector<8x128xf32>
    %125 = arith.maximumf %113, %124 : vector<8x128xf32>
    %c5_110 = arith.constant 5 : index
    %c0_111 = arith.constant 0 : index
    %c0_112 = arith.constant 0 : index
    %126 = vector.load %arg7[%c5_110, %c0_111, %c0_112] : memref<8x96x128xf32, #tpu.memory_space<vmem>>, vector<1x8x128xf32>
    %127 = vector.shape_cast %126 : vector<1x8x128xf32> to vector<8x128xf32>
    %128 = arith.addf %51, %127 : vector<8x128xf32>
    %c6_113 = arith.constant 6 : index
    %c8_114 = arith.constant 8 : index
    %c0_115 = arith.constant 0 : index
    %129 = vector.load %arg7[%c6_113, %c8_114, %c0_115] : memref<8x96x128xf32, #tpu.memory_space<vmem>>, vector<1x8x128xf32>
    %130 = vector.shape_cast %129 : vector<1x8x128xf32> to vector<8x128xf32>
    %131 = arith.addf %128, %130 : vector<8x128xf32>
    %c7_116 = arith.constant 7 : index
    %c16_117 = arith.constant 16 : index
    %c0_118 = arith.constant 0 : index
    %132 = vector.load %arg7[%c7_116, %c16_117, %c0_118] : memref<8x96x128xf32, #tpu.memory_space<vmem>>, vector<1x8x128xf32>
    %133 = vector.shape_cast %132 : vector<1x8x128xf32> to vector<8x128xf32>
    %134 = arith.addf %131, %133 : vector<8x128xf32>
    %cst_119 = arith.constant 0.000000e+00 : f32
    %135 = vector.broadcast %cst_119 : f32 to vector<8x128xf32>
    %136 = arith.maximumf %134, %135 : vector<8x128xf32>
    %137 = arith.maximumf %125, %136 : vector<8x128xf32>
    %c6_120 = arith.constant 6 : index
    %c0_121 = arith.constant 0 : index
    %c0_122 = arith.constant 0 : index
    %138 = vector.load %arg7[%c6_120, %c0_121, %c0_122] : memref<8x96x128xf32, #tpu.memory_space<vmem>>, vector<1x8x128xf32>
    %139 = vector.shape_cast %138 : vector<1x8x128xf32> to vector<8x128xf32>
    %140 = arith.addf %51, %139 : vector<8x128xf32>
    %c7_123 = arith.constant 7 : index
    %c8_124 = arith.constant 8 : index
    %c0_125 = arith.constant 0 : index
    %141 = vector.load %arg7[%c7_123, %c8_124, %c0_125] : memref<8x96x128xf32, #tpu.memory_space<vmem>>, vector<1x8x128xf32>
    %142 = vector.shape_cast %141 : vector<1x8x128xf32> to vector<8x128xf32>
    %143 = arith.addf %140, %142 : vector<8x128xf32>
    %cst_126 = arith.constant 0.000000e+00 : f32
    %144 = vector.broadcast %cst_126 : f32 to vector<8x128xf32>
    %145 = arith.maximumf %143, %144 : vector<8x128xf32>
    %146 = arith.maximumf %137, %145 : vector<8x128xf32>
    %c7_127 = arith.constant 7 : index
    %c0_128 = arith.constant 0 : index
    %c0_129 = arith.constant 0 : index
    %147 = vector.load %arg7[%c7_127, %c0_128, %c0_129] : memref<8x96x128xf32, #tpu.memory_space<vmem>>, vector<1x8x128xf32>
    %148 = vector.shape_cast %147 : vector<1x8x128xf32> to vector<8x128xf32>
    %149 = arith.addf %51, %148 : vector<8x128xf32>
    %cst_130 = arith.constant 0.000000e+00 : f32
    %150 = vector.broadcast %cst_130 : f32 to vector<8x128xf32>
    %151 = arith.maximumf %149, %150 : vector<8x128xf32>
    %152 = arith.maximumf %146, %151 : vector<8x128xf32>
    %c8_131 = arith.constant 8 : index
    %c0_132 = arith.constant 0 : index
    %153 = vector.load %arg3[%c8_131, %c0_132] : memref<24x1xf32, #tpu.memory_space<vmem>>, vector<8x1xf32>
    %154 = vector.shape_cast %153 : vector<8x1xf32> to vector<8x1xf32>
    %155 = vector.broadcast %154 : vector<8x1xf32> to vector<8x128xf32>
    %c0_133 = arith.constant 0 : index
    %c40 = arith.constant 40 : index
    %c0_134 = arith.constant 0 : index
    %156 = vector.load %arg7[%c0_133, %c40, %c0_134] : memref<8x96x128xf32, #tpu.memory_space<vmem>>, vector<1x8x128xf32>
    %157 = vector.shape_cast %156 : vector<1x8x128xf32> to vector<8x128xf32>
    %158 = arith.addf %155, %157 : vector<8x128xf32>
    %c1_135 = arith.constant 1 : index
    %c48 = arith.constant 48 : index
    %c0_136 = arith.constant 0 : index
    %159 = vector.load %arg7[%c1_135, %c48, %c0_136] : memref<8x96x128xf32, #tpu.memory_space<vmem>>, vector<1x8x128xf32>
    %160 = vector.shape_cast %159 : vector<1x8x128xf32> to vector<8x128xf32>
    %161 = arith.addf %158, %160 : vector<8x128xf32>
    %cst_137 = arith.constant 0.000000e+00 : f32
    %162 = vector.broadcast %cst_137 : f32 to vector<8x128xf32>
    %163 = arith.maximumf %161, %162 : vector<8x128xf32>
    %c0_138 = arith.constant 0 : index
    %c32 = arith.constant 32 : index
    %c0_139 = arith.constant 0 : index
    %164 = vector.load %arg7[%c0_138, %c32, %c0_139] : memref<8x96x128xf32, #tpu.memory_space<vmem>>, vector<1x8x128xf32>
    %165 = vector.shape_cast %164 : vector<1x8x128xf32> to vector<8x128xf32>
    %166 = arith.addf %155, %165 : vector<8x128xf32>
    %c1_140 = arith.constant 1 : index
    %c40_141 = arith.constant 40 : index
    %c0_142 = arith.constant 0 : index
    %167 = vector.load %arg7[%c1_140, %c40_141, %c0_142] : memref<8x96x128xf32, #tpu.memory_space<vmem>>, vector<1x8x128xf32>
    %168 = vector.shape_cast %167 : vector<1x8x128xf32> to vector<8x128xf32>
    %169 = arith.addf %166, %168 : vector<8x128xf32>
    %c2_143 = arith.constant 2 : index
    %c48_144 = arith.constant 48 : index
    %c0_145 = arith.constant 0 : index
    %170 = vector.load %arg7[%c2_143, %c48_144, %c0_145] : memref<8x96x128xf32, #tpu.memory_space<vmem>>, vector<1x8x128xf32>
    %171 = vector.shape_cast %170 : vector<1x8x128xf32> to vector<8x128xf32>
    %172 = arith.addf %169, %171 : vector<8x128xf32>
    %cst_146 = arith.constant 0.000000e+00 : f32
    %173 = vector.broadcast %cst_146 : f32 to vector<8x128xf32>
    %174 = arith.maximumf %172, %173 : vector<8x128xf32>
    %175 = arith.maximumf %163, %174 : vector<8x128xf32>
    %c0_147 = arith.constant 0 : index
    %c24 = arith.constant 24 : index
    %c0_148 = arith.constant 0 : index
    %176 = vector.load %arg7[%c0_147, %c24, %c0_148] : memref<8x96x128xf32, #tpu.memory_space<vmem>>, vector<1x8x128xf32>
    %177 = vector.shape_cast %176 : vector<1x8x128xf32> to vector<8x128xf32>
    %178 = arith.addf %155, %177 : vector<8x128xf32>
    %c1_149 = arith.constant 1 : index
    %c32_150 = arith.constant 32 : index
    %c0_151 = arith.constant 0 : index
    %179 = vector.load %arg7[%c1_149, %c32_150, %c0_151] : memref<8x96x128xf32, #tpu.memory_space<vmem>>, vector<1x8x128xf32>
    %180 = vector.shape_cast %179 : vector<1x8x128xf32> to vector<8x128xf32>
    %181 = arith.addf %178, %180 : vector<8x128xf32>
    %c2_152 = arith.constant 2 : index
    %c40_153 = arith.constant 40 : index
    %c0_154 = arith.constant 0 : index
    %182 = vector.load %arg7[%c2_152, %c40_153, %c0_154] : memref<8x96x128xf32, #tpu.memory_space<vmem>>, vector<1x8x128xf32>
    %183 = vector.shape_cast %182 : vector<1x8x128xf32> to vector<8x128xf32>
    %184 = arith.addf %181, %183 : vector<8x128xf32>
    %c3_155 = arith.constant 3 : index
    %c48_156 = arith.constant 48 : index
    %c0_157 = arith.constant 0 : index
    %185 = vector.load %arg7[%c3_155, %c48_156, %c0_157] : memref<8x96x128xf32, #tpu.memory_space<vmem>>, vector<1x8x128xf32>
    %186 = vector.shape_cast %185 : vector<1x8x128xf32> to vector<8x128xf32>
    %187 = arith.addf %184, %186 : vector<8x128xf32>
    %cst_158 = arith.constant 0.000000e+00 : f32
    %188 = vector.broadcast %cst_158 : f32 to vector<8x128xf32>
    %189 = arith.maximumf %187, %188 : vector<8x128xf32>
    %190 = arith.maximumf %175, %189 : vector<8x128xf32>
    %c1_159 = arith.constant 1 : index
    %c24_160 = arith.constant 24 : index
    %c0_161 = arith.constant 0 : index
    %191 = vector.load %arg7[%c1_159, %c24_160, %c0_161] : memref<8x96x128xf32, #tpu.memory_space<vmem>>, vector<1x8x128xf32>
    %192 = vector.shape_cast %191 : vector<1x8x128xf32> to vector<8x128xf32>
    %193 = arith.addf %155, %192 : vector<8x128xf32>
    %c2_162 = arith.constant 2 : index
    %c32_163 = arith.constant 32 : index
    %c0_164 = arith.constant 0 : index
    %194 = vector.load %arg7[%c2_162, %c32_163, %c0_164] : memref<8x96x128xf32, #tpu.memory_space<vmem>>, vector<1x8x128xf32>
    %195 = vector.shape_cast %194 : vector<1x8x128xf32> to vector<8x128xf32>
    %196 = arith.addf %193, %195 : vector<8x128xf32>
    %c3_165 = arith.constant 3 : index
    %c40_166 = arith.constant 40 : index
    %c0_167 = arith.constant 0 : index
    %197 = vector.load %arg7[%c3_165, %c40_166, %c0_167] : memref<8x96x128xf32, #tpu.memory_space<vmem>>, vector<1x8x128xf32>
    %198 = vector.shape_cast %197 : vector<1x8x128xf32> to vector<8x128xf32>
    %199 = arith.addf %196, %198 : vector<8x128xf32>
    %c4_168 = arith.constant 4 : index
    %c48_169 = arith.constant 48 : index
    %c0_170 = arith.constant 0 : index
    %200 = vector.load %arg7[%c4_168, %c48_169, %c0_170] : memref<8x96x128xf32, #tpu.memory_space<vmem>>, vector<1x8x128xf32>
    %201 = vector.shape_cast %200 : vector<1x8x128xf32> to vector<8x128xf32>
    %202 = arith.addf %199, %201 : vector<8x128xf32>
    %cst_171 = arith.constant 0.000000e+00 : f32
    %203 = vector.broadcast %cst_171 : f32 to vector<8x128xf32>
    %204 = arith.maximumf %202, %203 : vector<8x128xf32>
    %205 = arith.maximumf %190, %204 : vector<8x128xf32>
    %c2_172 = arith.constant 2 : index
    %c24_173 = arith.constant 24 : index
    %c0_174 = arith.constant 0 : index
    %206 = vector.load %arg7[%c2_172, %c24_173, %c0_174] : memref<8x96x128xf32, #tpu.memory_space<vmem>>, vector<1x8x128xf32>
    %207 = vector.shape_cast %206 : vector<1x8x128xf32> to vector<8x128xf32>
    %208 = arith.addf %155, %207 : vector<8x128xf32>
    %c3_175 = arith.constant 3 : index
    %c32_176 = arith.constant 32 : index
    %c0_177 = arith.constant 0 : index
    %209 = vector.load %arg7[%c3_175, %c32_176, %c0_177] : memref<8x96x128xf32, #tpu.memory_space<vmem>>, vector<1x8x128xf32>
    %210 = vector.shape_cast %209 : vector<1x8x128xf32> to vector<8x128xf32>
    %211 = arith.addf %208, %210 : vector<8x128xf32>
    %c4_178 = arith.constant 4 : index
    %c40_179 = arith.constant 40 : index
    %c0_180 = arith.constant 0 : index
    %212 = vector.load %arg7[%c4_178, %c40_179, %c0_180] : memref<8x96x128xf32, #tpu.memory_space<vmem>>, vector<1x8x128xf32>
    %213 = vector.shape_cast %212 : vector<1x8x128xf32> to vector<8x128xf32>
    %214 = arith.addf %211, %213 : vector<8x128xf32>
    %c5_181 = arith.constant 5 : index
    %c48_182 = arith.constant 48 : index
    %c0_183 = arith.constant 0 : index
    %215 = vector.load %arg7[%c5_181, %c48_182, %c0_183] : memref<8x96x128xf32, #tpu.memory_space<vmem>>, vector<1x8x128xf32>
    %216 = vector.shape_cast %215 : vector<1x8x128xf32> to vector<8x128xf32>
    %217 = arith.addf %214, %216 : vector<8x128xf32>
    %cst_184 = arith.constant 0.000000e+00 : f32
    %218 = vector.broadcast %cst_184 : f32 to vector<8x128xf32>
    %219 = arith.maximumf %217, %218 : vector<8x128xf32>
    %220 = arith.maximumf %205, %219 : vector<8x128xf32>
    %c3_185 = arith.constant 3 : index
    %c24_186 = arith.constant 24 : index
    %c0_187 = arith.constant 0 : index
    %221 = vector.load %arg7[%c3_185, %c24_186, %c0_187] : memref<8x96x128xf32, #tpu.memory_space<vmem>>, vector<1x8x128xf32>
    %222 = vector.shape_cast %221 : vector<1x8x128xf32> to vector<8x128xf32>
    %223 = arith.addf %155, %222 : vector<8x128xf32>
    %c4_188 = arith.constant 4 : index
    %c32_189 = arith.constant 32 : index
    %c0_190 = arith.constant 0 : index
    %224 = vector.load %arg7[%c4_188, %c32_189, %c0_190] : memref<8x96x128xf32, #tpu.memory_space<vmem>>, vector<1x8x128xf32>
    %225 = vector.shape_cast %224 : vector<1x8x128xf32> to vector<8x128xf32>
    %226 = arith.addf %223, %225 : vector<8x128xf32>
    %c5_191 = arith.constant 5 : index
    %c40_192 = arith.constant 40 : index
    %c0_193 = arith.constant 0 : index
    %227 = vector.load %arg7[%c5_191, %c40_192, %c0_193] : memref<8x96x128xf32, #tpu.memory_space<vmem>>, vector<1x8x128xf32>
    %228 = vector.shape_cast %227 : vector<1x8x128xf32> to vector<8x128xf32>
    %229 = arith.addf %226, %228 : vector<8x128xf32>
    %c6_194 = arith.constant 6 : index
    %c48_195 = arith.constant 48 : index
    %c0_196 = arith.constant 0 : index
    %230 = vector.load %arg7[%c6_194, %c48_195, %c0_196] : memref<8x96x128xf32, #tpu.memory_space<vmem>>, vector<1x8x128xf32>
    %231 = vector.shape_cast %230 : vector<1x8x128xf32> to vector<8x128xf32>
    %232 = arith.addf %229, %231 : vector<8x128xf32>
    %cst_197 = arith.constant 0.000000e+00 : f32
    %233 = vector.broadcast %cst_197 : f32 to vector<8x128xf32>
    %234 = arith.maximumf %232, %233 : vector<8x128xf32>
    %235 = arith.maximumf %220, %234 : vector<8x128xf32>
    %c4_198 = arith.constant 4 : index
    %c24_199 = arith.constant 24 : index
    %c0_200 = arith.constant 0 : index
    %236 = vector.load %arg7[%c4_198, %c24_199, %c0_200] : memref<8x96x128xf32, #tpu.memory_space<vmem>>, vector<1x8x128xf32>
    %237 = vector.shape_cast %236 : vector<1x8x128xf32> to vector<8x128xf32>
    %238 = arith.addf %155, %237 : vector<8x128xf32>
    %c5_201 = arith.constant 5 : index
    %c32_202 = arith.constant 32 : index
    %c0_203 = arith.constant 0 : index
    %239 = vector.load %arg7[%c5_201, %c32_202, %c0_203] : memref<8x96x128xf32, #tpu.memory_space<vmem>>, vector<1x8x128xf32>
    %240 = vector.shape_cast %239 : vector<1x8x128xf32> to vector<8x128xf32>
    %241 = arith.addf %238, %240 : vector<8x128xf32>
    %c6_204 = arith.constant 6 : index
    %c40_205 = arith.constant 40 : index
    %c0_206 = arith.constant 0 : index
    %242 = vector.load %arg7[%c6_204, %c40_205, %c0_206] : memref<8x96x128xf32, #tpu.memory_space<vmem>>, vector<1x8x128xf32>
    %243 = vector.shape_cast %242 : vector<1x8x128xf32> to vector<8x128xf32>
    %244 = arith.addf %241, %243 : vector<8x128xf32>
    %c7_207 = arith.constant 7 : index
    %c48_208 = arith.constant 48 : index
    %c0_209 = arith.constant 0 : index
    %245 = vector.load %arg7[%c7_207, %c48_208, %c0_209] : memref<8x96x128xf32, #tpu.memory_space<vmem>>, vector<1x8x128xf32>
    %246 = vector.shape_cast %245 : vector<1x8x128xf32> to vector<8x128xf32>
    %247 = arith.addf %244, %246 : vector<8x128xf32>
    %cst_210 = arith.constant 0.000000e+00 : f32
    %248 = vector.broadcast %cst_210 : f32 to vector<8x128xf32>
    %249 = arith.maximumf %247, %248 : vector<8x128xf32>
    %250 = arith.maximumf %235, %249 : vector<8x128xf32>
    %c5_211 = arith.constant 5 : index
    %c24_212 = arith.constant 24 : index
    %c0_213 = arith.constant 0 : index
    %251 = vector.load %arg7[%c5_211, %c24_212, %c0_213] : memref<8x96x128xf32, #tpu.memory_space<vmem>>, vector<1x8x128xf32>
    %252 = vector.shape_cast %251 : vector<1x8x128xf32> to vector<8x128xf32>
    %253 = arith.addf %155, %252 : vector<8x128xf32>
    %c6_214 = arith.constant 6 : index
    %c32_215 = arith.constant 32 : index
    %c0_216 = arith.constant 0 : index
    %254 = vector.load %arg7[%c6_214, %c32_215, %c0_216] : memref<8x96x128xf32, #tpu.memory_space<vmem>>, vector<1x8x128xf32>
    %255 = vector.shape_cast %254 : vector<1x8x128xf32> to vector<8x128xf32>
    %256 = arith.addf %253, %255 : vector<8x128xf32>
    %c7_217 = arith.constant 7 : index
    %c40_218 = arith.constant 40 : index
    %c0_219 = arith.constant 0 : index
    %257 = vector.load %arg7[%c7_217, %c40_218, %c0_219] : memref<8x96x128xf32, #tpu.memory_space<vmem>>, vector<1x8x128xf32>
    %258 = vector.shape_cast %257 : vector<1x8x128xf32> to vector<8x128xf32>
    %259 = arith.addf %256, %258 : vector<8x128xf32>
    %cst_220 = arith.constant 0.000000e+00 : f32
    %260 = vector.broadcast %cst_220 : f32 to vector<8x128xf32>
    %261 = arith.maximumf %259, %260 : vector<8x128xf32>
    %262 = arith.maximumf %250, %261 : vector<8x128xf32>
    %c6_221 = arith.constant 6 : index
    %c24_222 = arith.constant 24 : index
    %c0_223 = arith.constant 0 : index
    %263 = vector.load %arg7[%c6_221, %c24_222, %c0_223] : memref<8x96x128xf32, #tpu.memory_space<vmem>>, vector<1x8x128xf32>
    %264 = vector.shape_cast %263 : vector<1x8x128xf32> to vector<8x128xf32>
    %265 = arith.addf %155, %264 : vector<8x128xf32>
    %c7_224 = arith.constant 7 : index
    %c32_225 = arith.constant 32 : index
    %c0_226 = arith.constant 0 : index
    %266 = vector.load %arg7[%c7_224, %c32_225, %c0_226] : memref<8x96x128xf32, #tpu.memory_space<vmem>>, vector<1x8x128xf32>
    %267 = vector.shape_cast %266 : vector<1x8x128xf32> to vector<8x128xf32>
    %268 = arith.addf %265, %267 : vector<8x128xf32>
    %cst_227 = arith.constant 0.000000e+00 : f32
    %269 = vector.broadcast %cst_227 : f32 to vector<8x128xf32>
    %270 = arith.maximumf %268, %269 : vector<8x128xf32>
    %271 = arith.maximumf %262, %270 : vector<8x128xf32>
    %c16_228 = arith.constant 16 : index
    %c0_229 = arith.constant 0 : index
    %272 = vector.load %arg3[%c16_228, %c0_229] : memref<24x1xf32, #tpu.memory_space<vmem>>, vector<8x1xf32>
    %273 = vector.shape_cast %272 : vector<8x1xf32> to vector<8x1xf32>
    %274 = vector.broadcast %273 : vector<8x1xf32> to vector<8x128xf32>
    %c0_230 = arith.constant 0 : index
    %c72 = arith.constant 72 : index
    %c0_231 = arith.constant 0 : index
    %275 = vector.load %arg7[%c0_230, %c72, %c0_231] : memref<8x96x128xf32, #tpu.memory_space<vmem>>, vector<1x8x128xf32>
    %276 = vector.shape_cast %275 : vector<1x8x128xf32> to vector<8x128xf32>
    %277 = arith.addf %274, %276 : vector<8x128xf32>
    %c1_232 = arith.constant 1 : index
    %c80 = arith.constant 80 : index
    %c0_233 = arith.constant 0 : index
    %278 = vector.load %arg7[%c1_232, %c80, %c0_233] : memref<8x96x128xf32, #tpu.memory_space<vmem>>, vector<1x8x128xf32>
    %279 = vector.shape_cast %278 : vector<1x8x128xf32> to vector<8x128xf32>
    %280 = arith.addf %277, %279 : vector<8x128xf32>
    %c2_234 = arith.constant 2 : index
    %c88 = arith.constant 88 : index
    %c0_235 = arith.constant 0 : index
    %281 = vector.load %arg7[%c2_234, %c88, %c0_235] : memref<8x96x128xf32, #tpu.memory_space<vmem>>, vector<1x8x128xf32>
    %282 = vector.shape_cast %281 : vector<1x8x128xf32> to vector<8x128xf32>
    %283 = arith.addf %280, %282 : vector<8x128xf32>
    %cst_236 = arith.constant 0.000000e+00 : f32
    %284 = vector.broadcast %cst_236 : f32 to vector<8x128xf32>
    %285 = arith.maximumf %283, %284 : vector<8x128xf32>
    %c0_237 = arith.constant 0 : index
    %c64 = arith.constant 64 : index
    %c0_238 = arith.constant 0 : index
    %286 = vector.load %arg7[%c0_237, %c64, %c0_238] : memref<8x96x128xf32, #tpu.memory_space<vmem>>, vector<1x8x128xf32>
    %287 = vector.shape_cast %286 : vector<1x8x128xf32> to vector<8x128xf32>
    %288 = arith.addf %274, %287 : vector<8x128xf32>
    %c1_239 = arith.constant 1 : index
    %c72_240 = arith.constant 72 : index
    %c0_241 = arith.constant 0 : index
    %289 = vector.load %arg7[%c1_239, %c72_240, %c0_241] : memref<8x96x128xf32, #tpu.memory_space<vmem>>, vector<1x8x128xf32>
    %290 = vector.shape_cast %289 : vector<1x8x128xf32> to vector<8x128xf32>
    %291 = arith.addf %288, %290 : vector<8x128xf32>
    %c2_242 = arith.constant 2 : index
    %c80_243 = arith.constant 80 : index
    %c0_244 = arith.constant 0 : index
    %292 = vector.load %arg7[%c2_242, %c80_243, %c0_244] : memref<8x96x128xf32, #tpu.memory_space<vmem>>, vector<1x8x128xf32>
    %293 = vector.shape_cast %292 : vector<1x8x128xf32> to vector<8x128xf32>
    %294 = arith.addf %291, %293 : vector<8x128xf32>
    %c3_245 = arith.constant 3 : index
    %c88_246 = arith.constant 88 : index
    %c0_247 = arith.constant 0 : index
    %295 = vector.load %arg7[%c3_245, %c88_246, %c0_247] : memref<8x96x128xf32, #tpu.memory_space<vmem>>, vector<1x8x128xf32>
    %296 = vector.shape_cast %295 : vector<1x8x128xf32> to vector<8x128xf32>
    %297 = arith.addf %294, %296 : vector<8x128xf32>
    %cst_248 = arith.constant 0.000000e+00 : f32
    %298 = vector.broadcast %cst_248 : f32 to vector<8x128xf32>
    %299 = arith.maximumf %297, %298 : vector<8x128xf32>
    %300 = arith.maximumf %285, %299 : vector<8x128xf32>
    %c0_249 = arith.constant 0 : index
    %c56 = arith.constant 56 : index
    %c0_250 = arith.constant 0 : index
    %301 = vector.load %arg7[%c0_249, %c56, %c0_250] : memref<8x96x128xf32, #tpu.memory_space<vmem>>, vector<1x8x128xf32>
    %302 = vector.shape_cast %301 : vector<1x8x128xf32> to vector<8x128xf32>
    %303 = arith.addf %274, %302 : vector<8x128xf32>
    %c1_251 = arith.constant 1 : index
    %c64_252 = arith.constant 64 : index
    %c0_253 = arith.constant 0 : index
    %304 = vector.load %arg7[%c1_251, %c64_252, %c0_253] : memref<8x96x128xf32, #tpu.memory_space<vmem>>, vector<1x8x128xf32>
    %305 = vector.shape_cast %304 : vector<1x8x128xf32> to vector<8x128xf32>
    %306 = arith.addf %303, %305 : vector<8x128xf32>
    %c2_254 = arith.constant 2 : index
    %c72_255 = arith.constant 72 : index
    %c0_256 = arith.constant 0 : index
    %307 = vector.load %arg7[%c2_254, %c72_255, %c0_256] : memref<8x96x128xf32, #tpu.memory_space<vmem>>, vector<1x8x128xf32>
    %308 = vector.shape_cast %307 : vector<1x8x128xf32> to vector<8x128xf32>
    %309 = arith.addf %306, %308 : vector<8x128xf32>
    %c3_257 = arith.constant 3 : index
    %c80_258 = arith.constant 80 : index
    %c0_259 = arith.constant 0 : index
    %310 = vector.load %arg7[%c3_257, %c80_258, %c0_259] : memref<8x96x128xf32, #tpu.memory_space<vmem>>, vector<1x8x128xf32>
    %311 = vector.shape_cast %310 : vector<1x8x128xf32> to vector<8x128xf32>
    %312 = arith.addf %309, %311 : vector<8x128xf32>
    %c4_260 = arith.constant 4 : index
    %c88_261 = arith.constant 88 : index
    %c0_262 = arith.constant 0 : index
    %313 = vector.load %arg7[%c4_260, %c88_261, %c0_262] : memref<8x96x128xf32, #tpu.memory_space<vmem>>, vector<1x8x128xf32>
    %314 = vector.shape_cast %313 : vector<1x8x128xf32> to vector<8x128xf32>
    %315 = arith.addf %312, %314 : vector<8x128xf32>
    %cst_263 = arith.constant 0.000000e+00 : f32
    %316 = vector.broadcast %cst_263 : f32 to vector<8x128xf32>
    %317 = arith.maximumf %315, %316 : vector<8x128xf32>
    %318 = arith.maximumf %300, %317 : vector<8x128xf32>
    %c1_264 = arith.constant 1 : index
    %c56_265 = arith.constant 56 : index
    %c0_266 = arith.constant 0 : index
    %319 = vector.load %arg7[%c1_264, %c56_265, %c0_266] : memref<8x96x128xf32, #tpu.memory_space<vmem>>, vector<1x8x128xf32>
    %320 = vector.shape_cast %319 : vector<1x8x128xf32> to vector<8x128xf32>
    %321 = arith.addf %274, %320 : vector<8x128xf32>
    %c2_267 = arith.constant 2 : index
    %c64_268 = arith.constant 64 : index
    %c0_269 = arith.constant 0 : index
    %322 = vector.load %arg7[%c2_267, %c64_268, %c0_269] : memref<8x96x128xf32, #tpu.memory_space<vmem>>, vector<1x8x128xf32>
    %323 = vector.shape_cast %322 : vector<1x8x128xf32> to vector<8x128xf32>
    %324 = arith.addf %321, %323 : vector<8x128xf32>
    %c3_270 = arith.constant 3 : index
    %c72_271 = arith.constant 72 : index
    %c0_272 = arith.constant 0 : index
    %325 = vector.load %arg7[%c3_270, %c72_271, %c0_272] : memref<8x96x128xf32, #tpu.memory_space<vmem>>, vector<1x8x128xf32>
    %326 = vector.shape_cast %325 : vector<1x8x128xf32> to vector<8x128xf32>
    %327 = arith.addf %324, %326 : vector<8x128xf32>
    %c4_273 = arith.constant 4 : index
    %c80_274 = arith.constant 80 : index
    %c0_275 = arith.constant 0 : index
    %328 = vector.load %arg7[%c4_273, %c80_274, %c0_275] : memref<8x96x128xf32, #tpu.memory_space<vmem>>, vector<1x8x128xf32>
    %329 = vector.shape_cast %328 : vector<1x8x128xf32> to vector<8x128xf32>
    %330 = arith.addf %327, %329 : vector<8x128xf32>
    %c5_276 = arith.constant 5 : index
    %c88_277 = arith.constant 88 : index
    %c0_278 = arith.constant 0 : index
    %331 = vector.load %arg7[%c5_276, %c88_277, %c0_278] : memref<8x96x128xf32, #tpu.memory_space<vmem>>, vector<1x8x128xf32>
    %332 = vector.shape_cast %331 : vector<1x8x128xf32> to vector<8x128xf32>
    %333 = arith.addf %330, %332 : vector<8x128xf32>
    %cst_279 = arith.constant 0.000000e+00 : f32
    %334 = vector.broadcast %cst_279 : f32 to vector<8x128xf32>
    %335 = arith.maximumf %333, %334 : vector<8x128xf32>
    %336 = arith.maximumf %318, %335 : vector<8x128xf32>
    %c2_280 = arith.constant 2 : index
    %c56_281 = arith.constant 56 : index
    %c0_282 = arith.constant 0 : index
    %337 = vector.load %arg7[%c2_280, %c56_281, %c0_282] : memref<8x96x128xf32, #tpu.memory_space<vmem>>, vector<1x8x128xf32>
    %338 = vector.shape_cast %337 : vector<1x8x128xf32> to vector<8x128xf32>
    %339 = arith.addf %274, %338 : vector<8x128xf32>
    %c3_283 = arith.constant 3 : index
    %c64_284 = arith.constant 64 : index
    %c0_285 = arith.constant 0 : index
    %340 = vector.load %arg7[%c3_283, %c64_284, %c0_285] : memref<8x96x128xf32, #tpu.memory_space<vmem>>, vector<1x8x128xf32>
    %341 = vector.shape_cast %340 : vector<1x8x128xf32> to vector<8x128xf32>
    %342 = arith.addf %339, %341 : vector<8x128xf32>
    %c4_286 = arith.constant 4 : index
    %c72_287 = arith.constant 72 : index
    %c0_288 = arith.constant 0 : index
    %343 = vector.load %arg7[%c4_286, %c72_287, %c0_288] : memref<8x96x128xf32, #tpu.memory_space<vmem>>, vector<1x8x128xf32>
    %344 = vector.shape_cast %343 : vector<1x8x128xf32> to vector<8x128xf32>
    %345 = arith.addf %342, %344 : vector<8x128xf32>
    %c5_289 = arith.constant 5 : index
    %c80_290 = arith.constant 80 : index
    %c0_291 = arith.constant 0 : index
    %346 = vector.load %arg7[%c5_289, %c80_290, %c0_291] : memref<8x96x128xf32, #tpu.memory_space<vmem>>, vector<1x8x128xf32>
    %347 = vector.shape_cast %346 : vector<1x8x128xf32> to vector<8x128xf32>
    %348 = arith.addf %345, %347 : vector<8x128xf32>
    %c6_292 = arith.constant 6 : index
    %c88_293 = arith.constant 88 : index
    %c0_294 = arith.constant 0 : index
    %349 = vector.load %arg7[%c6_292, %c88_293, %c0_294] : memref<8x96x128xf32, #tpu.memory_space<vmem>>, vector<1x8x128xf32>
    %350 = vector.shape_cast %349 : vector<1x8x128xf32> to vector<8x128xf32>
    %351 = arith.addf %348, %350 : vector<8x128xf32>
    %cst_295 = arith.constant 0.000000e+00 : f32
    %352 = vector.broadcast %cst_295 : f32 to vector<8x128xf32>
    %353 = arith.maximumf %351, %352 : vector<8x128xf32>
    %354 = arith.maximumf %336, %353 : vector<8x128xf32>
    %c3_296 = arith.constant 3 : index
    %c56_297 = arith.constant 56 : index
    %c0_298 = arith.constant 0 : index
    %355 = vector.load %arg7[%c3_296, %c56_297, %c0_298] : memref<8x96x128xf32, #tpu.memory_space<vmem>>, vector<1x8x128xf32>
    %356 = vector.shape_cast %355 : vector<1x8x128xf32> to vector<8x128xf32>
    %357 = arith.addf %274, %356 : vector<8x128xf32>
    %c4_299 = arith.constant 4 : index
    %c64_300 = arith.constant 64 : index
    %c0_301 = arith.constant 0 : index
    %358 = vector.load %arg7[%c4_299, %c64_300, %c0_301] : memref<8x96x128xf32, #tpu.memory_space<vmem>>, vector<1x8x128xf32>
    %359 = vector.shape_cast %358 : vector<1x8x128xf32> to vector<8x128xf32>
    %360 = arith.addf %357, %359 : vector<8x128xf32>
    %c5_302 = arith.constant 5 : index
    %c72_303 = arith.constant 72 : index
    %c0_304 = arith.constant 0 : index
    %361 = vector.load %arg7[%c5_302, %c72_303, %c0_304] : memref<8x96x128xf32, #tpu.memory_space<vmem>>, vector<1x8x128xf32>
    %362 = vector.shape_cast %361 : vector<1x8x128xf32> to vector<8x128xf32>
    %363 = arith.addf %360, %362 : vector<8x128xf32>
    %c6_305 = arith.constant 6 : index
    %c80_306 = arith.constant 80 : index
    %c0_307 = arith.constant 0 : index
    %364 = vector.load %arg7[%c6_305, %c80_306, %c0_307] : memref<8x96x128xf32, #tpu.memory_space<vmem>>, vector<1x8x128xf32>
    %365 = vector.shape_cast %364 : vector<1x8x128xf32> to vector<8x128xf32>
    %366 = arith.addf %363, %365 : vector<8x128xf32>
    %c7_308 = arith.constant 7 : index
    %c88_309 = arith.constant 88 : index
    %c0_310 = arith.constant 0 : index
    %367 = vector.load %arg7[%c7_308, %c88_309, %c0_310] : memref<8x96x128xf32, #tpu.memory_space<vmem>>, vector<1x8x128xf32>
    %368 = vector.shape_cast %367 : vector<1x8x128xf32> to vector<8x128xf32>
    %369 = arith.addf %366, %368 : vector<8x128xf32>
    %cst_311 = arith.constant 0.000000e+00 : f32
    %370 = vector.broadcast %cst_311 : f32 to vector<8x128xf32>
    %371 = arith.maximumf %369, %370 : vector<8x128xf32>
    %372 = arith.maximumf %354, %371 : vector<8x128xf32>
    %c4_312 = arith.constant 4 : index
    %c56_313 = arith.constant 56 : index
    %c0_314 = arith.constant 0 : index
    %373 = vector.load %arg7[%c4_312, %c56_313, %c0_314] : memref<8x96x128xf32, #tpu.memory_space<vmem>>, vector<1x8x128xf32>
    %374 = vector.shape_cast %373 : vector<1x8x128xf32> to vector<8x128xf32>
    %375 = arith.addf %274, %374 : vector<8x128xf32>
    %c5_315 = arith.constant 5 : index
    %c64_316 = arith.constant 64 : index
    %c0_317 = arith.constant 0 : index
    %376 = vector.load %arg7[%c5_315, %c64_316, %c0_317] : memref<8x96x128xf32, #tpu.memory_space<vmem>>, vector<1x8x128xf32>
    %377 = vector.shape_cast %376 : vector<1x8x128xf32> to vector<8x128xf32>
    %378 = arith.addf %375, %377 : vector<8x128xf32>
    %c6_318 = arith.constant 6 : index
    %c72_319 = arith.constant 72 : index
    %c0_320 = arith.constant 0 : index
    %379 = vector.load %arg7[%c6_318, %c72_319, %c0_320] : memref<8x96x128xf32, #tpu.memory_space<vmem>>, vector<1x8x128xf32>
    %380 = vector.shape_cast %379 : vector<1x8x128xf32> to vector<8x128xf32>
    %381 = arith.addf %378, %380 : vector<8x128xf32>
    %c7_321 = arith.constant 7 : index
    %c80_322 = arith.constant 80 : index
    %c0_323 = arith.constant 0 : index
    %382 = vector.load %arg7[%c7_321, %c80_322, %c0_323] : memref<8x96x128xf32, #tpu.memory_space<vmem>>, vector<1x8x128xf32>
    %383 = vector.shape_cast %382 : vector<1x8x128xf32> to vector<8x128xf32>
    %384 = arith.addf %381, %383 : vector<8x128xf32>
    %cst_324 = arith.constant 0.000000e+00 : f32
    %385 = vector.broadcast %cst_324 : f32 to vector<8x128xf32>
    %386 = arith.maximumf %384, %385 : vector<8x128xf32>
    %387 = arith.maximumf %372, %386 : vector<8x128xf32>
    %c5_325 = arith.constant 5 : index
    %c56_326 = arith.constant 56 : index
    %c0_327 = arith.constant 0 : index
    %388 = vector.load %arg7[%c5_325, %c56_326, %c0_327] : memref<8x96x128xf32, #tpu.memory_space<vmem>>, vector<1x8x128xf32>
    %389 = vector.shape_cast %388 : vector<1x8x128xf32> to vector<8x128xf32>
    %390 = arith.addf %274, %389 : vector<8x128xf32>
    %c6_328 = arith.constant 6 : index
    %c64_329 = arith.constant 64 : index
    %c0_330 = arith.constant 0 : index
    %391 = vector.load %arg7[%c6_328, %c64_329, %c0_330] : memref<8x96x128xf32, #tpu.memory_space<vmem>>, vector<1x8x128xf32>
    %392 = vector.shape_cast %391 : vector<1x8x128xf32> to vector<8x128xf32>
    %393 = arith.addf %390, %392 : vector<8x128xf32>
    %c7_331 = arith.constant 7 : index
    %c72_332 = arith.constant 72 : index
    %c0_333 = arith.constant 0 : index
    %394 = vector.load %arg7[%c7_331, %c72_332, %c0_333] : memref<8x96x128xf32, #tpu.memory_space<vmem>>, vector<1x8x128xf32>
    %395 = vector.shape_cast %394 : vector<1x8x128xf32> to vector<8x128xf32>
    %396 = arith.addf %393, %395 : vector<8x128xf32>
    %cst_334 = arith.constant 0.000000e+00 : f32
    %397 = vector.broadcast %cst_334 : f32 to vector<8x128xf32>
    %398 = arith.maximumf %396, %397 : vector<8x128xf32>
    %399 = arith.maximumf %387, %398 : vector<8x128xf32>
    %400 = tpu.concatenate %152, %271, %399 in 0 : vector<8x128xf32>, vector<8x128xf32>, vector<8x128xf32> -> vector<24x128xf32>
    %c0_335 = arith.constant 0 : index
    %c0_336 = arith.constant 0 : index
    %401 = vector.load %arg4[%c0_335, %c0_336] : memref<2x24xf32, #tpu.memory_space<vmem>>, vector<2x24xf32>
    %cst_337 = arith.constant dense<0.000000e+00> : vector<2x128xf32>
    %402 = tpu.matmul %401, %400, %cst_337 {dimension_numbers = #tpu.dot_dimension_numbers<[1], [0], [0], [1], [0, 0, 1, 1], [], []>} : vector<2x24xf32>, vector<24x128xf32>, vector<2x128xf32> -> vector<2x128xf32>
    %c0_338 = arith.constant 0 : index
    %c0_339 = arith.constant 0 : index
    %403 = vector.load %arg5[%c0_338, %c0_339] : memref<2x1xf32, #tpu.memory_space<vmem>>, vector<2x1xf32>
    %404 = vector.shape_cast %403 : vector<2x1xf32> to vector<2x1xf32>
    %405 = vector.broadcast %404 : vector<2x1xf32> to vector<2x128xf32>
    %406 = arith.addf %402, %405 : vector<2x128xf32>
    %c0_340 = arith.constant 0 : index
    %c0_341 = arith.constant 0 : index
    %407 = vector.load %arg6[%c0_340, %c0_341] : memref<2x128xf32, #tpu.memory_space<vmem>>, vector<2x128xf32>
    tpu.vector_store %arg6[%c0_340, %c0_341], %406 {strides = array<i32>} : memref<2x128xf32, #tpu.memory_space<vmem>>, vector<2x128xf32>,
    return
  }
  func.func @transform_0(%arg0: i32) -> (i32, i32, i32) {
    %c0_i32 = arith.constant 0 : i32
    %c0_i32_0 = arith.constant 0 : i32
    %c0_i32_1 = arith.constant 0 : i32
    return %c0_i32, %c0_i32_0, %arg0 : i32, i32, i32
  }
  func.func @transform_1(%arg0: i32) -> (i32, i32) {
    %c0_i32 = arith.constant 0 : i32
    %c0_i32_0 = arith.constant 0 : i32
    %c0_i32_1 = arith.constant 0 : i32
    return %c0_i32, %c0_i32_0 : i32, i32
  }
  func.func @transform_2(%arg0: i32) -> (i32, i32) {
    %c0_i32 = arith.constant 0 : i32
    %c0_i32_0 = arith.constant 0 : i32
    %c0_i32_1 = arith.constant 0 : i32
    return %c0_i32, %c0_i32_0 : i32, i32
  }
  func.func @transform_3(%arg0: i32) -> (i32, i32) {
    %c0_i32 = arith.constant 0 : i32
    %c0_i32_0 = arith.constant 0 : i32
    %c0_i32_1 = arith.constant 0 : i32
    return %c0_i32, %c0_i32_0 : i32, i32
  }
  func.func @transform_4(%arg0: i32) -> (i32, i32) {
    %c0_i32 = arith.constant 0 : i32
    %c0_i32_0 = arith.constant 0 : i32
    %c0_i32_1 = arith.constant 0 : i32
    return %c0_i32, %c0_i32_0 : i32, i32
  }
  func.func @transform_5(%arg0: i32) -> (i32, i32) {
    %c0_i32 = arith.constant 0 : i32
    %c0_i32_0 = arith.constant 0 : i32
    return %c0_i32, %arg0 : i32, i32
  }
}

</mosaic_0001>

<llo_original>
// kernel: textcnn_forward.1
$region0: #{textcnn_forward.1}
  #allocation0 [shape = 'u32[]', space=smem, size = 0x4, offset = 0x4, fixed_abs, tag = 'smem constant byte address 0x4 - core index']
  #allocation1 [shape = 'u32[144,128]{1,0:T(1,128)}', space=vmem, size = 0x12000, scoped, tag = 'internal scratch']
  #allocation2 [shape = 'f32[8,96,128]{2,1,0:T(8,128)}', space=vmem, size = 0x60000, scoped, tag = 'scratch operand']
  %s0 = inlined_call_operand.vmem [shape: f32[8,50,128], index: 0, kind: input, shape index: {}]
  %s1 = inlined_call_operand.vmem [shape: f32[96,50], index: 1, kind: input, shape index: {}]
  %s2 = inlined_call_operand.vmem [shape: f32[24,1], index: 2, kind: input, shape index: {}]
  %s3 = inlined_call_operand.vmem [shape: f32[2,24], index: 3, kind: input, shape index: {}]
  %s4 = inlined_call_operand.vmem [shape: f32[2,1], index: 4, kind: input, shape index: {}]
  %s5 = inlined_call_operand.hbm [shape: f32[2,128], index: 5, kind: output, shape index: {}]
  %s6 = sld [smem:[#allocation0]]
  $region30: #{textcnn_forward.1} parent=0
    _
  %s8 = ssub.s32 1, %s6
  %s9 = scalar_select 0, %s8, %s6
  $region1: #{textcnn_forward.1} parent=0
    #allocation3 [shape = 'u8[1024]{0}', space=vmem, size = 0x400, scoped, tag = 'output window, operand 0, single buffered']
    #allocation4 [shape = 's32[1]{0}', space=sflag, size = 0x4, scoped, tag = 'scoped memory for textcnn_forward.1']
    %10 = vsyncpa [#allocation4], 0
    // Predicated region
    $region2: #{textcnn_forward.1} parent=1 // pred_check
      _
    $region3: #{textcnn_forward.1} parent=1 // pred_check_branch
      %12 = sbr.rel (0) target = $region5
    $region4: #{textcnn_forward.1} parent=1 // pred_region
      _
    $region5: #{textcnn_forward.1} parent=1 // pred_fallthru
      _
    // Predicated region
    $region6: #{textcnn_forward.1} parent=1 // pred_check
      _
    $region7: #{textcnn_forward.1} parent=1 // pred_check_branch
      %14 = sbr.rel (0) target = $region9
    $region8: #{textcnn_forward.1} parent=1 // pred_region
      _
    $region9: #{textcnn_forward.1} parent=1 // pred_fallthru
      _
    // Predicated region
    $region10: #{textcnn_forward.1} parent=1 // pred_check
      _
    $region11: #{textcnn_forward.1} parent=1 // pred_check_branch
      %16 = sbr.rel (0) target = $region13
    $region12: #{textcnn_forward.1} parent=1 // pred_region
      _
    $region13: #{textcnn_forward.1} parent=1 // pred_fallthru
      _
    // Predicated region
    $region14: #{textcnn_forward.1} parent=1 // pred_check
      _
    $region15: #{textcnn_forward.1} parent=1 // pred_check_branch
      %18 = sbr.rel (0) target = $region17
    $region16: #{textcnn_forward.1} parent=1 // pred_region
      _
    $region17: #{textcnn_forward.1} parent=1 // pred_fallthru
      _
    // Predicated region
    $region18: #{textcnn_forward.1} parent=1 // pred_check
      _
    $region19: #{textcnn_forward.1} parent=1 // pred_check_branch
      %20 = sbr.rel (0) target = $region21
    $region20: #{textcnn_forward.1} parent=1 // pred_region
      _
    $region21: #{textcnn_forward.1} parent=1 // pred_fallthru
      _
    %v21 = vld [vmem:[%s1] sm:$0xff]
    %v22 = vld [vmem:[%s1 + $0x8] sm:$0xff]
    %v23 = vld [vmem:[%s1 + $0x10] sm:$0xff]
    %v24 = vld [vmem:[%s1 + $0x18] sm:$0xff]
    %v25 = vld [vmem:[%s1 + $0x20] sm:$0xff]
    %v26 = vld [vmem:[%s1 + $0x28] sm:$0xff]
    %v27 = vld [vmem:[%s1 + $0x30] sm:$0xff]
    %v28 = vld [vmem:[%s1 + $0x38] sm:$0xff]
    %v29 = vld [vmem:[%s1 + $0x40] sm:$0xff]
    %v30 = vld [vmem:[%s1 + $0x48] sm:$0xff]
    %v31 = vld [vmem:[%s1 + $0x50] sm:$0xff]
    %v32 = vld [vmem:[%s1 + $0x58] sm:$0xff]
    %v33 = vld [vmem:[%s0] sm:$0xff]
    %v34 = vld [vmem:[%s0 + $0x8] sm:$0xff]
    %v35 = vld [vmem:[%s0 + $0x10] sm:$0xff]
    %v36 = vld [vmem:[%s0 + $0x18] sm:$0xff]
    %v37 = vld [vmem:[%s0 + $0x20] sm:$0xff]
    %v38 = vld [vmem:[%s0 + $0x28] sm:$0xff]
    %v39 = vld [vmem:[%s0 + $0x30] sm:$0x3]
    %vm40 = vcmask 408576
    %v42 = vsel %vm40, %v21, 0
    %v45 = vsel %vm40, %v22, 0
    %v48 = vsel %vm40, %v23, 0
    %v51 = vsel %vm40, %v24, 0
    %v54 = vsel %vm40, %v25, 0
    %v57 = vsel %vm40, %v26, 0
    %v60 = vsel %vm40, %v27, 0
    %v63 = vsel %vm40, %v28, 0
    %v66 = vsel %vm40, %v29, 0
    %v69 = vsel %vm40, %v30, 0
    %v72 = vsel %vm40, %v31, 0
    %v75 = vsel %vm40, %v32, 0
    %vm77 = vcmask 1041408
    %v79 = vsel %vm77, %v39, 0
    %81 = vmatprep.subr.mxu0 0.0
    %82 = vmatpush1.msra.mxu0 %v33
    %83 = vmatprep.subr.mxu0 0.0
    %84 = vmatpush1.msra.mxu0 %v34
    %85 = vmatprep.subr.mxu0 0.0
    %86 = vmatpush1.msra.mxu0 %v35
    %87 = vmatprep.subr.mxu0 0.0
    %88 = vmatpush1.msra.mxu0 %v36
    %89 = vmatprep.subr.mxu0 0.0
    %90 = vmatpush1.msra.mxu0 %v37
    %91 = vmatprep.subr.mxu0 0.0
    %92 = vmatpush1.msra.mxu0 %v38
    %93 = vmatprep.subr.mxu0 0.0
    %94 = vmatpush1.msra.mxu0 %v79
    %95 = vmatprep.subr.mxu0 0.0
    %96 = vmatpush1.msra.mxu0 0.0
    %97 = vmatprep.subr.mxu0 0.0
    %98 = vmatpush1.msra.mxu0 0.0
    %99 = vmatprep.subr.mxu0 0.0
    %100 = vmatpush1.msra.mxu0 0.0
    %101 = vmatprep.subr.mxu0 0.0
    %102 = vmatpush1.msra.mxu0 0.0
    %103 = vmatprep.subr.mxu0 0.0
    %104 = vmatpush1.msra.mxu0 0.0
    %105 = vmatprep.subr.mxu0 0.0
    %106 = vmatpush1.msra.mxu0 0.0
    %107 = vmatprep.subr.mxu0 0.0
    %108 = vmatpush1.msra.mxu0 0.0
    %109 = vmatprep.subr.mxu0 0.0
    %110 = vmatpush1.msra.mxu0 0.0
    %111 = vmatprep.subr.mxu0 0.0
    %112 = vmatpush1.msra.mxu0 0.0
    %113 = vmatprep.subr.mxu0 0.0
    %114 = vmatpush1.msra.mxu0 0.0
    %115 = vmatprep.subr.mxu0 0.0
    %116 = vmatpush1.msra.mxu0 0.0
    %117 = vmatprep.subr.mxu0 0.0
    %118 = vmatpush1.msra.mxu0 0.0
    %119 = vmatprep.subr.mxu0 0.0
    %120 = vmatpush1.msra.mxu0 0.0
    %121 = vmatprep.subr.mxu0 0.0
    %122 = vmatpush1.msra.mxu0 0.0
    %123 = vmatprep.subr.mxu0 0.0
    %124 = vmatpush1.msra.mxu0 0.0
    %125 = vmatprep.subr.mxu0 0.0
    %126 = vmatpush1.msra.mxu0 0.0
    %127 = vmatprep.subr.mxu0 0.0
    %128 = vmatpush1.msra.mxu0 0.0
    %129 = vmatprep.subr.mxu0 0.0
    %130 = vmatpush1.msra.mxu0 0.0
    %131 = vmatprep.subr.mxu0 0.0
    %132 = vmatpush1.msra.mxu0 0.0
    %133 = vmatprep.subr.mxu0 0.0
    %134 = vmatpush1.msra.mxu0 0.0
    %135 = vmatprep.subr.mxu0 0.0
    %136 = vmatpush1.msra.mxu0 0.0
    %137 = vmatprep.subr.mxu0 0.0
    %138 = vmatpush1.msra.mxu0 0.0
    %139 = vmatprep.subr.mxu0 0.0
    %140 = vmatpush1.msra.mxu0 0.0
    %141 = vmatprep.subr.mxu0 0.0
    %142 = vmatpush1.msra.mxu0 0.0
    %143 = vmatprep.subr.mxu0 0.0
    %144 = vmatpush1.msra.mxu0 0.0
    %145 = vmatprep.mubr.f32.mxu0 0.0
    %146 = vmatmul.mubr.f32.gmra.mrb[0].mxu0 %v42
    %v147 = vpop.f32.mrb[0].mxu0
    %v148 = vadd.f32 0.0, %v147
    %v149 = vpop.f32.mrb[0].mxu0
    %150 = vmatprep.mubr.f32.mxu0 0.0
    %151 = vmatmul.mubr.f32.gmra.mrb[0].mxu0 %v45
    %v152 = vpop.f32.mrb[0].mxu0
    %v153 = vadd.f32 0.0, %v152
    %v154 = vpop.f32.mrb[0].mxu0
    %155 = vmatprep.mubr.f32.mxu0 0.0
    %156 = vmatmul.mubr.f32.gmra.mrb[0].mxu0 %v48
    %v157 = vpop.f32.mrb[0].mxu0
    %v158 = vadd.f32 0.0, %v157
    %v159 = vpop.f32.mrb[0].mxu0
    %160 = vmatprep.mubr.f32.mxu0 0.0
    %161 = vmatmul.mubr.f32.gmra.mrb[0].mxu0 %v51
    %v162 = vpop.f32.mrb[0].mxu0
    %v163 = vadd.f32 0.0, %v162
    %v164 = vpop.f32.mrb[0].mxu0
    %165 = vmatprep.mubr.f32.mxu0 0.0
    %166 = vmatmul.mubr.f32.gmra.mrb[0].mxu0 %v54
    %v167 = vpop.f32.mrb[0].mxu0
    %v168 = vadd.f32 0.0, %v167
    %v169 = vpop.f32.mrb[0].mxu0
    %170 = vmatprep.mubr.f32.mxu0 0.0
    %171 = vmatmul.mubr.f32.gmra.mrb[0].mxu0 %v57
    %v172 = vpop.f32.mrb[0].mxu0
    %v173 = vadd.f32 0.0, %v172
    %v174 = vpop.f32.mrb[0].mxu0
    %175 = vmatprep.mubr.f32.mxu0 0.0
    %176 = vmatmul.mubr.f32.gmra.mrb[0].mxu0 %v60
    %v177 = vpop.f32.mrb[0].mxu0
    %v178 = vadd.f32 0.0, %v177
    %v179 = vpop.f32.mrb[0].mxu0
    %180 = vmatprep.mubr.f32.mxu0 0.0
    %181 = vmatmul.mubr.f32.gmra.mrb[0].mxu0 %v63
    %v182 = vpop.f32.mrb[0].mxu0
    %v183 = vadd.f32 0.0, %v182
    %v184 = vpop.f32.mrb[0].mxu0
    %185 = vmatprep.mubr.f32.mxu0 0.0
    %186 = vmatmul.mubr.f32.gmra.mrb[0].mxu0 %v66
    %v187 = vpop.f32.mrb[0].mxu0
    %v188 = vadd.f32 0.0, %v187
    %v189 = vpop.f32.mrb[0].mxu0
    %190 = vmatprep.mubr.f32.mxu0 0.0
    %191 = vmatmul.mubr.f32.gmra.mrb[0].mxu0 %v69
    %v192 = vpop.f32.mrb[0].mxu0
    %v193 = vadd.f32 0.0, %v192
    %v194 = vpop.f32.mrb[0].mxu0
    %195 = vmatprep.mubr.f32.mxu0 0.0
    %196 = vmatmul.mubr.f32.gmra.mrb[0].mxu0 %v72
    %v197 = vpop.f32.mrb[0].mxu0
    %v198 = vadd.f32 0.0, %v197
    %v199 = vpop.f32.mrb[0].mxu0
    %200 = vmatprep.mubr.f32.mxu0 0.0
    %201 = vmatmul.mubr.f32.gmra.mrb[0].mxu0 %v75
    %v202 = vpop.f32.mrb[0].mxu0
    %v203 = vadd.f32 0.0, %v202
    %v204 = vpop.f32.mrb[0].mxu0
    %205 = vdwg.mxu0
    %206 = vst [vmem:[#allocation2] sm:$0xff] %v148
    %207 = vst [vmem:[#allocation2 + $0x8] sm:$0xff] %v153
    %208 = vst [vmem:[#allocation2 + $0x10] sm:$0xff] %v158
    %209 = vst [vmem:[#allocation2 + $0x18] sm:$0xff] %v163
    %210 = vst [vmem:[#allocation2 + $0x20] sm:$0xff] %v168
    %211 = vst [vmem:[#allocation2 + $0x28] sm:$0xff] %v173
    %212 = vst [vmem:[#allocation2 + $0x30] sm:$0xff] %v178
    %213 = vst [vmem:[#allocation2 + $0x38] sm:$0xff] %v183
    %214 = vst [vmem:[#allocation2 + $0x40] sm:$0xff] %v188
    %215 = vst [vmem:[#allocation2 + $0x48] sm:$0xff] %v193
    %216 = vst [vmem:[#allocation2 + $0x50] sm:$0xff] %v198
    %217 = vst [vmem:[#allocation2 + $0x58] sm:$0xff] %v203
    %s218 = scalar_lea.vmem %s0, 56
    %v219 = vld [vmem:[%s218] sm:$0xff]
    %v220 = vld [vmem:[%s218 + $0x8] sm:$0xff]
    %v221 = vld [vmem:[%s218 + $0x10] sm:$0xff]
    %v222 = vld [vmem:[%s218 + $0x18] sm:$0xff]
    %v223 = vld [vmem:[%s218 + $0x20] sm:$0xff]
    %v224 = vld [vmem:[%s218 + $0x28] sm:$0xff]
    %v225 = vld [vmem:[%s218 + $0x30] sm:$0x3]
    %v227 = vsel %vm77, %v225, 0
    %229 = vmatprep.subr.mxu0 0.0
    %230 = vmatpush1.msra.mxu0 %v219
    %231 = vmatprep.subr.mxu0 0.0
    %232 = vmatpush1.msra.mxu0 %v220
    %233 = vmatprep.subr.mxu0 0.0
    %234 = vmatpush1.msra.mxu0 %v221
    %235 = vmatprep.subr.mxu0 0.0
    %236 = vmatpush1.msra.mxu0 %v222
    %237 = vmatprep.subr.mxu0 0.0
    %238 = vmatpush1.msra.mxu0 %v223
    %239 = vmatprep.subr.mxu0 0.0
    %240 = vmatpush1.msra.mxu0 %v224
    %241 = vmatprep.subr.mxu0 0.0
    %242 = vmatpush1.msra.mxu0 %v227
    %243 = vmatprep.subr.mxu0 0.0
    %244 = vmatpush1.msra.mxu0 0.0
    %245 = vmatprep.subr.mxu0 0.0
    %246 = vmatpush1.msra.mxu0 0.0
    %247 = vmatprep.subr.mxu0 0.0
    %248 = vmatpush1.msra.mxu0 0.0
    %249 = vmatprep.subr.mxu0 0.0
    %250 = vmatpush1.msra.mxu0 0.0
    %251 = vmatprep.subr.mxu0 0.0
    %252 = vmatpush1.msra.mxu0 0.0
    %253 = vmatprep.subr.mxu0 0.0
    %254 = vmatpush1.msra.mxu0 0.0
    %255 = vmatprep.subr.mxu0 0.0
    %256 = vmatpush1.msra.mxu0 0.0
    %257 = vmatprep.subr.mxu0 0.0
    %258 = vmatpush1.msra.mxu0 0.0
    %259 = vmatprep.subr.mxu0 0.0
    %260 = vmatpush1.msra.mxu0 0.0
    %261 = vmatprep.subr.mxu0 0.0
    %262 = vmatpush1.msra.mxu0 0.0
    %263 = vmatprep.subr.mxu0 0.0
    %264 = vmatpush1.msra.mxu0 0.0
    %265 = vmatprep.subr.mxu0 0.0
    %266 = vmatpush1.msra.mxu0 0.0
    %267 = vmatprep.subr.mxu0 0.0
    %268 = vmatpush1.msra.mxu0 0.0
    %269 = vmatprep.subr.mxu0 0.0
    %270 = vmatpush1.msra.mxu0 0.0
    %271 = vmatprep.subr.mxu0 0.0
    %272 = vmatpush1.msra.mxu0 0.0
    %273 = vmatprep.subr.mxu0 0.0
    %274 = vmatpush1.msra.mxu0 0.0
    %275 = vmatprep.subr.mxu0 0.0
    %276 = vmatpush1.msra.mxu0 0.0
    %277 = vmatprep.subr.mxu0 0.0
    %278 = vmatpush1.msra.mxu0 0.0
    %279 = vmatprep.subr.mxu0 0.0
    %280 = vmatpush1.msra.mxu0 0.0
    %281 = vmatprep.subr.mxu0 0.0
    %282 = vmatpush1.msra.mxu0 0.0
    %283 = vmatprep.subr.mxu0 0.0
    %284 = vmatpush1.msra.mxu0 0.0
    %285 = vmatprep.subr.mxu0 0.0
    %286 = vmatpush1.msra.mxu0 0.0
    %287 = vmatprep.subr.mxu0 0.0
    %288 = vmatpush1.msra.mxu0 0.0
    %289 = vmatprep.subr.mxu0 0.0
    %290 = vmatpush1.msra.mxu0 0.0
    %291 = vmatprep.subr.mxu0 0.0
    %292 = vmatpush1.msra.mxu0 0.0
    %293 = vmatprep.mubr.f32.mxu0 0.0
    %294 = vmatmul.mubr.f32.gmra.mrb[0].mxu0 %v42
    %v295 = vpop.f32.mrb[0].mxu0
    %v296 = vadd.f32 0.0, %v295
    %v297 = vpop.f32.mrb[0].mxu0
    %298 = vmatprep.mubr.f32.mxu0 0.0
    %299 = vmatmul.mubr.f32.gmra.mrb[0].mxu0 %v45
    %v300 = vpop.f32.mrb[0].mxu0
    %v301 = vadd.f32 0.0, %v300
    %v302 = vpop.f32.mrb[0].mxu0
    %303 = vmatprep.mubr.f32.mxu0 0.0
    %304 = vmatmul.mubr.f32.gmra.mrb[0].mxu0 %v48
    %v305 = vpop.f32.mrb[0].mxu0
    %v306 = vadd.f32 0.0, %v305
    %v307 = vpop.f32.mrb[0].mxu0
    %308 = vmatprep.mubr.f32.mxu0 0.0
    %309 = vmatmul.mubr.f32.gmra.mrb[0].mxu0 %v51
    %v310 = vpop.f32.mrb[0].mxu0
    %v311 = vadd.f32 0.0, %v310
    %v312 = vpop.f32.mrb[0].mxu0
    %313 = vmatprep.mubr.f32.mxu0 0.0
    %314 = vmatmul.mubr.f32.gmra.mrb[0].mxu0 %v54
    %v315 = vpop.f32.mrb[0].mxu0
    %v316 = vadd.f32 0.0, %v315
    %v317 = vpop.f32.mrb[0].mxu0
    %318 = vmatprep.mubr.f32.mxu0 0.0
    %319 = vmatmul.mubr.f32.gmra.mrb[0].mxu0 %v57
    %v320 = vpop.f32.mrb[0].mxu0
    %v321 = vadd.f32 0.0, %v320
    %v322 = vpop.f32.mrb[0].mxu0
    %323 = vmatprep.mubr.f32.mxu0 0.0
    %324 = vmatmul.mubr.f32.gmra.mrb[0].mxu0 %v60
    %v325 = vpop.f32.mrb[0].mxu0
    %v326 = vadd.f32 0.0, %v325
    %v327 = vpop.f32.mrb[0].mxu0
    %328 = vmatprep.mubr.f32.mxu0 0.0
    %329 = vmatmul.mubr.f32.gmra.mrb[0].mxu0 %v63
    %v330 = vpop.f32.mrb[0].mxu0
    %v331 = vadd.f32 0.0, %v330
    %v332 = vpop.f32.mrb[0].mxu0
    %333 = vmatprep.mubr.f32.mxu0 0.0
    %334 = vmatmul.mubr.f32.gmra.mrb[0].mxu0 %v66
    %v335 = vpop.f32.mrb[0].mxu0
    %v336 = vadd.f32 0.0, %v335
    %v337 = vpop.f32.mrb[0].mxu0
    %338 = vmatprep.mubr.f32.mxu0 0.0
    %339 = vmatmul.mubr.f32.gmra.mrb[0].mxu0 %v69
    %v340 = vpop.f32.mrb[0].mxu0
    %v341 = vadd.f32 0.0, %v340
    %v342 = vpop.f32.mrb[0].mxu0
    %343 = vmatprep.mubr.f32.mxu0 0.0
    %344 = vmatmul.mubr.f32.gmra.mrb[0].mxu0 %v72
    %v345 = vpop.f32.mrb[0].mxu0
    %v346 = vadd.f32 0.0, %v345
    %v347 = vpop.f32.mrb[0].mxu0
    %348 = vmatprep.mubr.f32.mxu0 0.0
    %349 = vmatmul.mubr.f32.gmra.mrb[0].mxu0 %v75
    %v350 = vpop.f32.mrb[0].mxu0
    %v351 = vadd.f32 0.0, %v350
    %v352 = vpop.f32.mrb[0].mxu0
    %353 = vdwg.mxu0
    %s354 = scalar_lea.vmem [#allocation2], 96
    %355 = vst [vmem:[%s354] sm:$0xff] %v296
    %356 = vst [vmem:[%s354 + $0x8] sm:$0xff] %v301
    %357 = vst [vmem:[%s354 + $0x10] sm:$0xff] %v306
    %358 = vst [vmem:[%s354 + $0x18] sm:$0xff] %v311
    %359 = vst [vmem:[%s354 + $0x20] sm:$0xff] %v316
    %360 = vst [vmem:[%s354 + $0x28] sm:$0xff] %v321
    %361 = vst [vmem:[%s354 + $0x30] sm:$0xff] %v326
    %362 = vst [vmem:[%s354 + $0x38] sm:$0xff] %v331
    %363 = vst [vmem:[%s354 + $0x40] sm:$0xff] %v336
    %364 = vst [vmem:[%s354 + $0x48] sm:$0xff] %v341
    %365 = vst [vmem:[%s354 + $0x50] sm:$0xff] %v346
    %366 = vst [vmem:[%s354 + $0x58] sm:$0xff] %v351
    %s367 = scalar_lea.vmem %s0, 112
    %v368 = vld [vmem:[%s367] sm:$0xff]
    %v369 = vld [vmem:[%s367 + $0x8] sm:$0xff]
    %v370 = vld [vmem:[%s367 + $0x10] sm:$0xff]
    %v371 = vld [vmem:[%s367 + $0x18] sm:$0xff]
    %v372 = vld [vmem:[%s367 + $0x20] sm:$0xff]
    %v373 = vld [vmem:[%s367 + $0x28] sm:$0xff]
    %v374 = vld [vmem:[%s367 + $0x30] sm:$0x3]
    %v376 = vsel %vm77, %v374, 0
    %378 = vmatprep.subr.mxu0 0.0
    %379 = vmatpush1.msra.mxu0 %v368
    %380 = vmatprep.subr.mxu0 0.0
    %381 = vmatpush1.msra.mxu0 %v369
    %382 = vmatprep.subr.mxu0 0.0
    %383 = vmatpush1.msra.mxu0 %v370
    %384 = vmatprep.subr.mxu0 0.0
    %385 = vmatpush1.msra.mxu0 %v371
    %386 = vmatprep.subr.mxu0 0.0
    %387 = vmatpush1.msra.mxu0 %v372
    %388 = vmatprep.subr.mxu0 0.0
    %389 = vmatpush1.msra.mxu0 %v373
    %390 = vmatprep.subr.mxu0 0.0
    %391 = vmatpush1.msra.mxu0 %v376
    %392 = vmatprep.subr.mxu0 0.0
    %393 = vmatpush1.msra.mxu0 0.0
    %394 = vmatprep.subr.mxu0 0.0
    %395 = vmatpush1.msra.mxu0 0.0
    %396 = vmatprep.subr.mxu0 0.0
    %397 = vmatpush1.msra.mxu0 0.0
    %398 = vmatprep.subr.mxu0 0.0
    %399 = vmatpush1.msra.mxu0 0.0
    %400 = vmatprep.subr.mxu0 0.0
    %401 = vmatpush1.msra.mxu0 0.0
    %402 = vmatprep.subr.mxu0 0.0
    %403 = vmatpush1.msra.mxu0 0.0
    %404 = vmatprep.subr.mxu0 0.0
    %405 = vmatpush1.msra.mxu0 0.0
    %406 = vmatprep.subr.mxu0 0.0
    %407 = vmatpush1.msra.mxu0 0.0
    %408 = vmatprep.subr.mxu0 0.0
    %409 = vmatpush1.msra.mxu0 0.0
    %410 = vmatprep.subr.mxu0 0.0
    %411 = vmatpush1.msra.mxu0 0.0
    %412 = vmatprep.subr.mxu0 0.0
    %413 = vmatpush1.msra.mxu0 0.0
    %414 = vmatprep.subr.mxu0 0.0
    %415 = vmatpush1.msra.mxu0 0.0
    %416 = vmatprep.subr.mxu0 0.0
    %417 = vmatpush1.msra.mxu0 0.0
    %418 = vmatprep.subr.mxu0 0.0
    %419 = vmatpush1.msra.mxu0 0.0
    %420 = vmatprep.subr.mxu0 0.0
    %421 = vmatpush1.msra.mxu0 0.0
    %422 = vmatprep.subr.mxu0 0.0
    %423 = vmatpush1.msra.mxu0 0.0
    %424 = vmatprep.subr.mxu0 0.0
    %425 = vmatpush1.msra.mxu0 0.0
    %426 = vmatprep.subr.mxu0 0.0
    %427 = vmatpush1.msra.mxu0 0.0
    %428 = vmatprep.subr.mxu0 0.0
    %429 = vmatpush1.msra.mxu0 0.0
    %430 = vmatprep.subr.mxu0 0.0
    %431 = vmatpush1.msra.mxu0 0.0
    %432 = vmatprep.subr.mxu0 0.0
    %433 = vmatpush1.msra.mxu0 0.0
    %434 = vmatprep.subr.mxu0 0.0
    %435 = vmatpush1.msra.mxu0 0.0
    %436 = vmatprep.subr.mxu0 0.0
    %437 = vmatpush1.msra.mxu0 0.0
    %438 = vmatprep.subr.mxu0 0.0
    %439 = vmatpush1.msra.mxu0 0.0
    %440 = vmatprep.subr.mxu0 0.0
    %441 = vmatpush1.msra.mxu0 0.0
    %442 = vmatprep.mubr.f32.mxu0 0.0
    %443 = vmatmul.mubr.f32.gmra.mrb[0].mxu0 %v42
    %v444 = vpop.f32.mrb[0].mxu0
    %v445 = vadd.f32 0.0, %v444
    %v446 = vpop.f32.mrb[0].mxu0
    %447 = vmatprep.mubr.f32.mxu0 0.0
    %448 = vmatmul.mubr.f32.gmra.mrb[0].mxu0 %v45
    %v449 = vpop.f32.mrb[0].mxu0
    %v450 = vadd.f32 0.0, %v449
    %v451 = vpop.f32.mrb[0].mxu0
    %452 = vmatprep.mubr.f32.mxu0 0.0
    %453 = vmatmul.mubr.f32.gmra.mrb[0].mxu0 %v48
    %v454 = vpop.f32.mrb[0].mxu0
    %v455 = vadd.f32 0.0, %v454
    %v456 = vpop.f32.mrb[0].mxu0
    %457 = vmatprep.mubr.f32.mxu0 0.0
    %458 = vmatmul.mubr.f32.gmra.mrb[0].mxu0 %v51
    %v459 = vpop.f32.mrb[0].mxu0
    %v460 = vadd.f32 0.0, %v459
    %v461 = vpop.f32.mrb[0].mxu0
    %462 = vmatprep.mubr.f32.mxu0 0.0
    %463 = vmatmul.mubr.f32.gmra.mrb[0].mxu0 %v54
    %v464 = vpop.f32.mrb[0].mxu0
    %v465 = vadd.f32 0.0, %v464
    %v466 = vpop.f32.mrb[0].mxu0
    %467 = vmatprep.mubr.f32.mxu0 0.0
    %468 = vmatmul.mubr.f32.gmra.mrb[0].mxu0 %v57
    %v469 = vpop.f32.mrb[0].mxu0
    %v470 = vadd.f32 0.0, %v469
    %v471 = vpop.f32.mrb[0].mxu0
    %472 = vmatprep.mubr.f32.mxu0 0.0
    %473 = vmatmul.mubr.f32.gmra.mrb[0].mxu0 %v60
    %v474 = vpop.f32.mrb[0].mxu0
    %v475 = vadd.f32 0.0, %v474
    %v476 = vpop.f32.mrb[0].mxu0
    %477 = vmatprep.mubr.f32.mxu0 0.0
    %478 = vmatmul.mubr.f32.gmra.mrb[0].mxu0 %v63
    %v479 = vpop.f32.mrb[0].mxu0
    %v480 = vadd.f32 0.0, %v479
    %v481 = vpop.f32.mrb[0].mxu0
    %482 = vmatprep.mubr.f32.mxu0 0.0
    %483 = vmatmul.mubr.f32.gmra.mrb[0].mxu0 %v66
    %v484 = vpop.f32.mrb[0].mxu0
    %v485 = vadd.f32 0.0, %v484
    %v486 = vpop.f32.mrb[0].mxu0
    %487 = vmatprep.mubr.f32.mxu0 0.0
    %488 = vmatmul.mubr.f32.gmra.mrb[0].mxu0 %v69
    %v489 = vpop.f32.mrb[0].mxu0
    %v490 = vadd.f32 0.0, %v489
    %v491 = vpop.f32.mrb[0].mxu0
    %492 = vmatprep.mubr.f32.mxu0 0.0
    %493 = vmatmul.mubr.f32.gmra.mrb[0].mxu0 %v72
    %v494 = vpop.f32.mrb[0].mxu0
    %v495 = vadd.f32 0.0, %v494
    %v496 = vpop.f32.mrb[0].mxu0
    %497 = vmatprep.mubr.f32.mxu0 0.0
    %498 = vmatmul.mubr.f32.gmra.mrb[0].mxu0 %v75
    %v499 = vpop.f32.mrb[0].mxu0
    %v500 = vadd.f32 0.0, %v499
    %v501 = vpop.f32.mrb[0].mxu0
    %502 = vdwg.mxu0
    %s503 = scalar_lea.vmem [#allocation2], 192
    %504 = vst [vmem:[%s503] sm:$0xff] %v445
    %505 = vst [vmem:[%s503 + $0x8] sm:$0xff] %v450
    %506 = vst [vmem:[%s503 + $0x10] sm:$0xff] %v455
    %507 = vst [vmem:[%s503 + $0x18] sm:$0xff] %v460
    %508 = vst [vmem:[%s503 + $0x20] sm:$0xff] %v465
    %509 = vst [vmem:[%s503 + $0x28] sm:$0xff] %v470
    %510 = vst [vmem:[%s503 + $0x30] sm:$0xff] %v475
    %511 = vst [vmem:[%s503 + $0x38] sm:$0xff] %v480
    %512 = vst [vmem:[%s503 + $0x40] sm:$0xff] %v485
    %513 = vst [vmem:[%s503 + $0x48] sm:$0xff] %v490
    %514 = vst [vmem:[%s503 + $0x50] sm:$0xff] %v495
    %515 = vst [vmem:[%s503 + $0x58] sm:$0xff] %v500
    %s516 = scalar_lea.vmem %s0, 168
    %v517 = vld [vmem:[%s516] sm:$0xff]
    %v518 = vld [vmem:[%s516 + $0x8] sm:$0xff]
    %v519 = vld [vmem:[%s516 + $0x10] sm:$0xff]
    %v520 = vld [vmem:[%s516 + $0x18] sm:$0xff]
    %v521 = vld [vmem:[%s516 + $0x20] sm:$0xff]
    %v522 = vld [vmem:[%s516 + $0x28] sm:$0xff]
    %v523 = vld [vmem:[%s516 + $0x30] sm:$0x3]
    %v525 = vsel %vm77, %v523, 0
    %527 = vmatprep.subr.mxu0 0.0
    %528 = vmatpush1.msra.mxu0 %v517
    %529 = vmatprep.subr.mxu0 0.0
    %530 = vmatpush1.msra.mxu0 %v518
    %531 = vmatprep.subr.mxu0 0.0
    %532 = vmatpush1.msra.mxu0 %v519
    %533 = vmatprep.subr.mxu0 0.0
    %534 = vmatpush1.msra.mxu0 %v520
    %535 = vmatprep.subr.mxu0 0.0
    %536 = vmatpush1.msra.mxu0 %v521
    %537 = vmatprep.subr.mxu0 0.0
    %538 = vmatpush1.msra.mxu0 %v522
    %539 = vmatprep.subr.mxu0 0.0
    %540 = vmatpush1.msra.mxu0 %v525
    %541 = vmatprep.subr.mxu0 0.0
    %542 = vmatpush1.msra.mxu0 0.0
    %543 = vmatprep.subr.mxu0 0.0
    %544 = vmatpush1.msra.mxu0 0.0
    %545 = vmatprep.subr.mxu0 0.0
    %546 = vmatpush1.msra.mxu0 0.0
    %547 = vmatprep.subr.mxu0 0.0
    %548 = vmatpush1.msra.mxu0 0.0
    %549 = vmatprep.subr.mxu0 0.0
    %550 = vmatpush1.msra.mxu0 0.0
    %551 = vmatprep.subr.mxu0 0.0
    %552 = vmatpush1.msra.mxu0 0.0
    %553 = vmatprep.subr.mxu0 0.0
    %554 = vmatpush1.msra.mxu0 0.0
    %555 = vmatprep.subr.mxu0 0.0
    %556 = vmatpush1.msra.mxu0 0.0
    %557 = vmatprep.subr.mxu0 0.0
    %558 = vmatpush1.msra.mxu0 0.0
    %559 = vmatprep.subr.mxu0 0.0
    %560 = vmatpush1.msra.mxu0 0.0
    %561 = vmatprep.subr.mxu0 0.0
    %562 = vmatpush1.msra.mxu0 0.0
    %563 = vmatprep.subr.mxu0 0.0
    %564 = vmatpush1.msra.mxu0 0.0
    %565 = vmatprep.subr.mxu0 0.0
    %566 = vmatpush1.msra.mxu0 0.0
    %567 = vmatprep.subr.mxu0 0.0
    %568 = vmatpush1.msra.mxu0 0.0
    %569 = vmatprep.subr.mxu0 0.0
    %570 = vmatpush1.msra.mxu0 0.0
    %571 = vmatprep.subr.mxu0 0.0
    %572 = vmatpush1.msra.mxu0 0.0
    %573 = vmatprep.subr.mxu0 0.0
    %574 = vmatpush1.msra.mxu0 0.0
    %575 = vmatprep.subr.mxu0 0.0
    %576 = vmatpush1.msra.mxu0 0.0
    %577 = vmatprep.subr.mxu0 0.0
    %578 = vmatpush1.msra.mxu0 0.0
    %579 = vmatprep.subr.mxu0 0.0
    %580 = vmatpush1.msra.mxu0 0.0
    %581 = vmatprep.subr.mxu0 0.0
    %582 = vmatpush1.msra.mxu0 0.0
    %583 = vmatprep.subr.mxu0 0.0
    %584 = vmatpush1.msra.mxu0 0.0
    %585 = vmatprep.subr.mxu0 0.0
    %586 = vmatpush1.msra.mxu0 0.0
    %587 = vmatprep.subr.mxu0 0.0
    %588 = vmatpush1.msra.mxu0 0.0
    %589 = vmatprep.subr.mxu0 0.0
    %590 = vmatpush1.msra.mxu0 0.0
    %591 = vmatprep.mubr.f32.mxu0 0.0
    %592 = vmatmul.mubr.f32.gmra.mrb[0].mxu0 %v42
    %v593 = vpop.f32.mrb[0].mxu0
    %v594 = vadd.f32 0.0, %v593
    %v595 = vpop.f32.mrb[0].mxu0
    %596 = vmatprep.mubr.f32.mxu0 0.0
    %597 = vmatmul.mubr.f32.gmra.mrb[0].mxu0 %v45
    %v598 = vpop.f32.mrb[0].mxu0
    %v599 = vadd.f32 0.0, %v598
    %v600 = vpop.f32.mrb[0].mxu0
    %601 = vmatprep.mubr.f32.mxu0 0.0
    %602 = vmatmul.mubr.f32.gmra.mrb[0].mxu0 %v48
    %v603 = vpop.f32.mrb[0].mxu0
    %v604 = vadd.f32 0.0, %v603
    %v605 = vpop.f32.mrb[0].mxu0
    %606 = vmatprep.mubr.f32.mxu0 0.0
    %607 = vmatmul.mubr.f32.gmra.mrb[0].mxu0 %v51
    %v608 = vpop.f32.mrb[0].mxu0
    %v609 = vadd.f32 0.0, %v608
    %v610 = vpop.f32.mrb[0].mxu0
    %611 = vmatprep.mubr.f32.mxu0 0.0
    %612 = vmatmul.mubr.f32.gmra.mrb[0].mxu0 %v54
    %v613 = vpop.f32.mrb[0].mxu0
    %v614 = vadd.f32 0.0, %v613
    %v615 = vpop.f32.mrb[0].mxu0
    %616 = vmatprep.mubr.f32.mxu0 0.0
    %617 = vmatmul.mubr.f32.gmra.mrb[0].mxu0 %v57
    %v618 = vpop.f32.mrb[0].mxu0
    %v619 = vadd.f32 0.0, %v618
    %v620 = vpop.f32.mrb[0].mxu0
    %621 = vmatprep.mubr.f32.mxu0 0.0
    %622 = vmatmul.mubr.f32.gmra.mrb[0].mxu0 %v60
    %v623 = vpop.f32.mrb[0].mxu0
    %v624 = vadd.f32 0.0, %v623
    %v625 = vpop.f32.mrb[0].mxu0
    %626 = vmatprep.mubr.f32.mxu0 0.0
    %627 = vmatmul.mubr.f32.gmra.mrb[0].mxu0 %v63
    %v628 = vpop.f32.mrb[0].mxu0
    %v629 = vadd.f32 0.0, %v628
    %v630 = vpop.f32.mrb[0].mxu0
    %631 = vmatprep.mubr.f32.mxu0 0.0
    %632 = vmatmul.mubr.f32.gmra.mrb[0].mxu0 %v66
    %v633 = vpop.f32.mrb[0].mxu0
    %v634 = vadd.f32 0.0, %v633
    %v635 = vpop.f32.mrb[0].mxu0
    %636 = vmatprep.mubr.f32.mxu0 0.0
    %637 = vmatmul.mubr.f32.gmra.mrb[0].mxu0 %v69
    %v638 = vpop.f32.mrb[0].mxu0
    %v639 = vadd.f32 0.0, %v638
    %v640 = vpop.f32.mrb[0].mxu0
    %641 = vmatprep.mubr.f32.mxu0 0.0
    %642 = vmatmul.mubr.f32.gmra.mrb[0].mxu0 %v72
    %v643 = vpop.f32.mrb[0].mxu0
    %v644 = vadd.f32 0.0, %v643
    %v645 = vpop.f32.mrb[0].mxu0
    %646 = vmatprep.mubr.f32.mxu0 0.0
    %647 = vmatmul.mubr.f32.gmra.mrb[0].mxu0 %v75
    %v648 = vpop.f32.mrb[0].mxu0
    %v649 = vadd.f32 0.0, %v648
    %v650 = vpop.f32.mrb[0].mxu0
    %651 = vdwg.mxu0
    %s652 = scalar_lea.vmem [#allocation2], 288
    %653 = vst [vmem:[%s652] sm:$0xff] %v594
    %654 = vst [vmem:[%s652 + $0x8] sm:$0xff] %v599
    %655 = vst [vmem:[%s652 + $0x10] sm:$0xff] %v604
    %656 = vst [vmem:[%s652 + $0x18] sm:$0xff] %v609
    %657 = vst [vmem:[%s652 + $0x20] sm:$0xff] %v614
    %658 = vst [vmem:[%s652 + $0x28] sm:$0xff] %v619
    %659 = vst [vmem:[%s652 + $0x30] sm:$0xff] %v624
    %660 = vst [vmem:[%s652 + $0x38] sm:$0xff] %v629
    %661 = vst [vmem:[%s652 + $0x40] sm:$0xff] %v634
    %662 = vst [vmem:[%s652 + $0x48] sm:$0xff] %v639
    %663 = vst [vmem:[%s652 + $0x50] sm:$0xff] %v644
    %664 = vst [vmem:[%s652 + $0x58] sm:$0xff] %v649
    %s665 = scalar_lea.vmem %s0, 224
    %v666 = vld [vmem:[%s665] sm:$0xff]
    %v667 = vld [vmem:[%s665 + $0x8] sm:$0xff]
    %v668 = vld [vmem:[%s665 + $0x10] sm:$0xff]
    %v669 = vld [vmem:[%s665 + $0x18] sm:$0xff]
    %v670 = vld [vmem:[%s665 + $0x20] sm:$0xff]
    %v671 = vld [vmem:[%s665 + $0x28] sm:$0xff]
    %v672 = vld [vmem:[%s665 + $0x30] sm:$0x3]
    %v674 = vsel %vm77, %v672, 0
    %676 = vmatprep.subr.mxu0 0.0
    %677 = vmatpush1.msra.mxu0 %v666
    %678 = vmatprep.subr.mxu0 0.0
    %679 = vmatpush1.msra.mxu0 %v667
    %680 = vmatprep.subr.mxu0 0.0
    %681 = vmatpush1.msra.mxu0 %v668
    %682 = vmatprep.subr.mxu0 0.0
    %683 = vmatpush1.msra.mxu0 %v669
    %684 = vmatprep.subr.mxu0 0.0
    %685 = vmatpush1.msra.mxu0 %v670
    %686 = vmatprep.subr.mxu0 0.0
    %687 = vmatpush1.msra.mxu0 %v671
    %688 = vmatprep.subr.mxu0 0.0
    %689 = vmatpush1.msra.mxu0 %v674
    %690 = vmatprep.subr.mxu0 0.0
    %691 = vmatpush1.msra.mxu0 0.0
    %692 = vmatprep.subr.mxu0 0.0
    %693 = vmatpush1.msra.mxu0 0.0
    %694 = vmatprep.subr.mxu0 0.0
    %695 = vmatpush1.msra.mxu0 0.0
    %696 = vmatprep.subr.mxu0 0.0
    %697 = vmatpush1.msra.mxu0 0.0
    %698 = vmatprep.subr.mxu0 0.0
    %699 = vmatpush1.msra.mxu0 0.0
    %700 = vmatprep.subr.mxu0 0.0
    %701 = vmatpush1.msra.mxu0 0.0
    %702 = vmatprep.subr.mxu0 0.0
    %703 = vmatpush1.msra.mxu0 0.0
    %704 = vmatprep.subr.mxu0 0.0
    %705 = vmatpush1.msra.mxu0 0.0
    %706 = vmatprep.subr.mxu0 0.0
    %707 = vmatpush1.msra.mxu0 0.0
    %708 = vmatprep.subr.mxu0 0.0
    %709 = vmatpush1.msra.mxu0 0.0
    %710 = vmatprep.subr.mxu0 0.0
    %711 = vmatpush1.msra.mxu0 0.0
    %712 = vmatprep.subr.mxu0 0.0
    %713 = vmatpush1.msra.mxu0 0.0
    %714 = vmatprep.subr.mxu0 0.0
    %715 = vmatpush1.msra.mxu0 0.0
    %716 = vmatprep.subr.mxu0 0.0
    %717 = vmatpush1.msra.mxu0 0.0
    %718 = vmatprep.subr.mxu0 0.0
    %719 = vmatpush1.msra.mxu0 0.0
    %720 = vmatprep.subr.mxu0 0.0
    %721 = vmatpush1.msra.mxu0 0.0
    %722 = vmatprep.subr.mxu0 0.0
    %723 = vmatpush1.msra.mxu0 0.0
    %724 = vmatprep.subr.mxu0 0.0
    %725 = vmatpush1.msra.mxu0 0.0
    %726 = vmatprep.subr.mxu0 0.0
    %727 = vmatpush1.msra.mxu0 0.0
    %728 = vmatprep.subr.mxu0 0.0
    %729 = vmatpush1.msra.mxu0 0.0
    %730 = vmatprep.subr.mxu0 0.0
    %731 = vmatpush1.msra.mxu0 0.0
    %732 = vmatprep.subr.mxu0 0.0
    %733 = vmatpush1.msra.mxu0 0.0
    %734 = vmatprep.subr.mxu0 0.0
    %735 = vmatpush1.msra.mxu0 0.0
    %736 = vmatprep.subr.mxu0 0.0
    %737 = vmatpush1.msra.mxu0 0.0
    %738 = vmatprep.subr.mxu0 0.0
    %739 = vmatpush1.msra.mxu0 0.0
    %740 = vmatprep.mubr.f32.mxu0 0.0
    %741 = vmatmul.mubr.f32.gmra.mrb[0].mxu0 %v42
    %v742 = vpop.f32.mrb[0].mxu0
    %v743 = vadd.f32 0.0, %v742
    %v744 = vpop.f32.mrb[0].mxu0
    %745 = vmatprep.mubr.f32.mxu0 0.0
    %746 = vmatmul.mubr.f32.gmra.mrb[0].mxu0 %v45
    %v747 = vpop.f32.mrb[0].mxu0
    %v748 = vadd.f32 0.0, %v747
    %v749 = vpop.f32.mrb[0].mxu0
    %750 = vmatprep.mubr.f32.mxu0 0.0
    %751 = vmatmul.mubr.f32.gmra.mrb[0].mxu0 %v48
    %v752 = vpop.f32.mrb[0].mxu0
    %v753 = vadd.f32 0.0, %v752
    %v754 = vpop.f32.mrb[0].mxu0
    %755 = vmatprep.mubr.f32.mxu0 0.0
    %756 = vmatmul.mubr.f32.gmra.mrb[0].mxu0 %v51
    %v757 = vpop.f32.mrb[0].mxu0
    %v758 = vadd.f32 0.0, %v757
    %v759 = vpop.f32.mrb[0].mxu0
    %760 = vmatprep.mubr.f32.mxu0 0.0
    %761 = vmatmul.mubr.f32.gmra.mrb[0].mxu0 %v54
    %v762 = vpop.f32.mrb[0].mxu0
    %v763 = vadd.f32 0.0, %v762
    %v764 = vpop.f32.mrb[0].mxu0
    %765 = vmatprep.mubr.f32.mxu0 0.0
    %766 = vmatmul.mubr.f32.gmra.mrb[0].mxu0 %v57
    %v767 = vpop.f32.mrb[0].mxu0
    %v768 = vadd.f32 0.0, %v767
    %v769 = vpop.f32.mrb[0].mxu0
    %770 = vmatprep.mubr.f32.mxu0 0.0
    %771 = vmatmul.mubr.f32.gmra.mrb[0].mxu0 %v60
    %v772 = vpop.f32.mrb[0].mxu0
    %v773 = vadd.f32 0.0, %v772
    %v774 = vpop.f32.mrb[0].mxu0
    %775 = vmatprep.mubr.f32.mxu0 0.0
    %776 = vmatmul.mubr.f32.gmra.mrb[0].mxu0 %v63
    %v777 = vpop.f32.mrb[0].mxu0
    %v778 = vadd.f32 0.0, %v777
    %v779 = vpop.f32.mrb[0].mxu0
    %780 = vmatprep.mubr.f32.mxu0 0.0
    %781 = vmatmul.mubr.f32.gmra.mrb[0].mxu0 %v66
    %v782 = vpop.f32.mrb[0].mxu0
    %v783 = vadd.f32 0.0, %v782
    %v784 = vpop.f32.mrb[0].mxu0
    %785 = vmatprep.mubr.f32.mxu0 0.0
    %786 = vmatmul.mubr.f32.gmra.mrb[0].mxu0 %v69
    %v787 = vpop.f32.mrb[0].mxu0
    %v788 = vadd.f32 0.0, %v787
    %v789 = vpop.f32.mrb[0].mxu0
    %790 = vmatprep.mubr.f32.mxu0 0.0
    %791 = vmatmul.mubr.f32.gmra.mrb[0].mxu0 %v72
    %v792 = vpop.f32.mrb[0].mxu0
    %v793 = vadd.f32 0.0, %v792
    %v794 = vpop.f32.mrb[0].mxu0
    %795 = vmatprep.mubr.f32.mxu0 0.0
    %796 = vmatmul.mubr.f32.gmra.mrb[0].mxu0 %v75
    %v797 = vpop.f32.mrb[0].mxu0
    %v798 = vadd.f32 0.0, %v797
    %v799 = vpop.f32.mrb[0].mxu0
    %800 = vdwg.mxu0
    %s801 = scalar_lea.vmem [#allocation2], 384
    %802 = vst [vmem:[%s801] sm:$0xff] %v743
    %803 = vst [vmem:[%s801 + $0x8] sm:$0xff] %v748
    %804 = vst [vmem:[%s801 + $0x10] sm:$0xff] %v753
    %805 = vst [vmem:[%s801 + $0x18] sm:$0xff] %v758
    %806 = vst [vmem:[%s801 + $0x20] sm:$0xff] %v763
    %807 = vst [vmem:[%s801 + $0x28] sm:$0xff] %v768
    %808 = vst [vmem:[%s801 + $0x30] sm:$0xff] %v773
    %809 = vst [vmem:[%s801 + $0x38] sm:$0xff] %v778
    %810 = vst [vmem:[%s801 + $0x40] sm:$0xff] %v783
    %811 = vst [vmem:[%s801 + $0x48] sm:$0xff] %v788
    %812 = vst [vmem:[%s801 + $0x50] sm:$0xff] %v793
    %813 = vst [vmem:[%s801 + $0x58] sm:$0xff] %v798
    %s814 = scalar_lea.vmem %s0, 280
    %v815 = vld [vmem:[%s814] sm:$0xff]
    %v816 = vld [vmem:[%s814 + $0x8] sm:$0xff]
    %v817 = vld [vmem:[%s814 + $0x10] sm:$0xff]
    %v818 = vld [vmem:[%s814 + $0x18] sm:$0xff]
    %v819 = vld [vmem:[%s814 + $0x20] sm:$0xff]
    %v820 = vld [vmem:[%s814 + $0x28] sm:$0xff]
    %v821 = vld [vmem:[%s814 + $0x30] sm:$0x3]
    %v823 = vsel %vm77, %v821, 0
    %825 = vmatprep.subr.mxu0 0.0
    %826 = vmatpush1.msra.mxu0 %v815
    %827 = vmatprep.subr.mxu0 0.0
    %828 = vmatpush1.msra.mxu0 %v816
    %829 = vmatprep.subr.mxu0 0.0
    %830 = vmatpush1.msra.mxu0 %v817
    %831 = vmatprep.subr.mxu0 0.0
    %832 = vmatpush1.msra.mxu0 %v818
    %833 = vmatprep.subr.mxu0 0.0
    %834 = vmatpush1.msra.mxu0 %v819
    %835 = vmatprep.subr.mxu0 0.0
    %836 = vmatpush1.msra.mxu0 %v820
    %837 = vmatprep.subr.mxu0 0.0
    %838 = vmatpush1.msra.mxu0 %v823
    %839 = vmatprep.subr.mxu0 0.0
    %840 = vmatpush1.msra.mxu0 0.0
    %841 = vmatprep.subr.mxu0 0.0
    %842 = vmatpush1.msra.mxu0 0.0
    %843 = vmatprep.subr.mxu0 0.0
    %844 = vmatpush1.msra.mxu0 0.0
    %845 = vmatprep.subr.mxu0 0.0
    %846 = vmatpush1.msra.mxu0 0.0
    %847 = vmatprep.subr.mxu0 0.0
    %848 = vmatpush1.msra.mxu0 0.0
    %849 = vmatprep.subr.mxu0 0.0
    %850 = vmatpush1.msra.mxu0 0.0
    %851 = vmatprep.subr.mxu0 0.0
    %852 = vmatpush1.msra.mxu0 0.0
    %853 = vmatprep.subr.mxu0 0.0
    %854 = vmatpush1.msra.mxu0 0.0
    %855 = vmatprep.subr.mxu0 0.0
    %856 = vmatpush1.msra.mxu0 0.0
    %857 = vmatprep.subr.mxu0 0.0
    %858 = vmatpush1.msra.mxu0 0.0
    %859 = vmatprep.subr.mxu0 0.0
    %860 = vmatpush1.msra.mxu0 0.0
    %861 = vmatprep.subr.mxu0 0.0
    %862 = vmatpush1.msra.mxu0 0.0
    %863 = vmatprep.subr.mxu0 0.0
    %864 = vmatpush1.msra.mxu0 0.0
    %865 = vmatprep.subr.mxu0 0.0
    %866 = vmatpush1.msra.mxu0 0.0
    %867 = vmatprep.subr.mxu0 0.0
    %868 = vmatpush1.msra.mxu0 0.0
    %869 = vmatprep.subr.mxu0 0.0
    %870 = vmatpush1.msra.mxu0 0.0
    %871 = vmatprep.subr.mxu0 0.0
    %872 = vmatpush1.msra.mxu0 0.0
    %873 = vmatprep.subr.mxu0 0.0
    %874 = vmatpush1.msra.mxu0 0.0
    %875 = vmatprep.subr.mxu0 0.0
    %876 = vmatpush1.msra.mxu0 0.0
    %877 = vmatprep.subr.mxu0 0.0
    %878 = vmatpush1.msra.mxu0 0.0
    %879 = vmatprep.subr.mxu0 0.0
    %880 = vmatpush1.msra.mxu0 0.0
    %881 = vmatprep.subr.mxu0 0.0
    %882 = vmatpush1.msra.mxu0 0.0
    %883 = vmatprep.subr.mxu0 0.0
    %884 = vmatpush1.msra.mxu0 0.0
    %885 = vmatprep.subr.mxu0 0.0
    %886 = vmatpush1.msra.mxu0 0.0
    %887 = vmatprep.subr.mxu0 0.0
    %888 = vmatpush1.msra.mxu0 0.0
    %889 = vmatprep.mubr.f32.mxu0 0.0
    %890 = vmatmul.mubr.f32.gmra.mrb[0].mxu0 %v42
    %v891 = vpop.f32.mrb[0].mxu0
    %v892 = vadd.f32 0.0, %v891
    %v893 = vpop.f32.mrb[0].mxu0
    %894 = vmatprep.mubr.f32.mxu0 0.0
    %895 = vmatmul.mubr.f32.gmra.mrb[0].mxu0 %v45
    %v896 = vpop.f32.mrb[0].mxu0
    %v897 = vadd.f32 0.0, %v896
    %v898 = vpop.f32.mrb[0].mxu0
    %899 = vmatprep.mubr.f32.mxu0 0.0
    %900 = vmatmul.mubr.f32.gmra.mrb[0].mxu0 %v48
    %v901 = vpop.f32.mrb[0].mxu0
    %v902 = vadd.f32 0.0, %v901
    %v903 = vpop.f32.mrb[0].mxu0
    %904 = vmatprep.mubr.f32.mxu0 0.0
    %905 = vmatmul.mubr.f32.gmra.mrb[0].mxu0 %v51
    %v906 = vpop.f32.mrb[0].mxu0
    %v907 = vadd.f32 0.0, %v906
    %v908 = vpop.f32.mrb[0].mxu0
    %909 = vmatprep.mubr.f32.mxu0 0.0
    %910 = vmatmul.mubr.f32.gmra.mrb[0].mxu0 %v54
    %v911 = vpop.f32.mrb[0].mxu0
    %v912 = vadd.f32 0.0, %v911
    %v913 = vpop.f32.mrb[0].mxu0
    %914 = vmatprep.mubr.f32.mxu0 0.0
    %915 = vmatmul.mubr.f32.gmra.mrb[0].mxu0 %v57
    %v916 = vpop.f32.mrb[0].mxu0
    %v917 = vadd.f32 0.0, %v916
    %v918 = vpop.f32.mrb[0].mxu0
    %919 = vmatprep.mubr.f32.mxu0 0.0
    %920 = vmatmul.mubr.f32.gmra.mrb[0].mxu0 %v60
    %v921 = vpop.f32.mrb[0].mxu0
    %v922 = vadd.f32 0.0, %v921
    %v923 = vpop.f32.mrb[0].mxu0
    %924 = vmatprep.mubr.f32.mxu0 0.0
    %925 = vmatmul.mubr.f32.gmra.mrb[0].mxu0 %v63
    %v926 = vpop.f32.mrb[0].mxu0
    %v927 = vadd.f32 0.0, %v926
    %v928 = vpop.f32.mrb[0].mxu0
    %929 = vmatprep.mubr.f32.mxu0 0.0
    %930 = vmatmul.mubr.f32.gmra.mrb[0].mxu0 %v66
    %v931 = vpop.f32.mrb[0].mxu0
    %v932 = vadd.f32 0.0, %v931
    %v933 = vpop.f32.mrb[0].mxu0
    %934 = vmatprep.mubr.f32.mxu0 0.0
    %935 = vmatmul.mubr.f32.gmra.mrb[0].mxu0 %v69
    %v936 = vpop.f32.mrb[0].mxu0
    %v937 = vadd.f32 0.0, %v936
    %v938 = vpop.f32.mrb[0].mxu0
    %939 = vmatprep.mubr.f32.mxu0 0.0
    %940 = vmatmul.mubr.f32.gmra.mrb[0].mxu0 %v72
    %v941 = vpop.f32.mrb[0].mxu0
    %v942 = vadd.f32 0.0, %v941
    %v943 = vpop.f32.mrb[0].mxu0
    %944 = vmatprep.mubr.f32.mxu0 0.0
    %945 = vmatmul.mubr.f32.gmra.mrb[0].mxu0 %v75
    %v946 = vpop.f32.mrb[0].mxu0
    %v947 = vadd.f32 0.0, %v946
    %v948 = vpop.f32.mrb[0].mxu0
    %949 = vdwg.mxu0
    %s950 = scalar_lea.vmem [#allocation2], 480
    %951 = vst [vmem:[%s950] sm:$0xff] %v892
    %952 = vst [vmem:[%s950 + $0x8] sm:$0xff] %v897
    %953 = vst [vmem:[%s950 + $0x10] sm:$0xff] %v902
    %954 = vst [vmem:[%s950 + $0x18] sm:$0xff] %v907
    %955 = vst [vmem:[%s950 + $0x20] sm:$0xff] %v912
    %956 = vst [vmem:[%s950 + $0x28] sm:$0xff] %v917
    %957 = vst [vmem:[%s950 + $0x30] sm:$0xff] %v922
    %958 = vst [vmem:[%s950 + $0x38] sm:$0xff] %v927
    %959 = vst [vmem:[%s950 + $0x40] sm:$0xff] %v932
    %960 = vst [vmem:[%s950 + $0x48] sm:$0xff] %v937
    %961 = vst [vmem:[%s950 + $0x50] sm:$0xff] %v942
    %962 = vst [vmem:[%s950 + $0x58] sm:$0xff] %v947
    %s963 = scalar_lea.vmem %s0, 336
    %v964 = vld [vmem:[%s963] sm:$0xff]
    %v965 = vld [vmem:[%s963 + $0x8] sm:$0xff]
    %v966 = vld [vmem:[%s963 + $0x10] sm:$0xff]
    %v967 = vld [vmem:[%s963 + $0x18] sm:$0xff]
    %v968 = vld [vmem:[%s963 + $0x20] sm:$0xff]
    %v969 = vld [vmem:[%s963 + $0x28] sm:$0xff]
    %v970 = vld [vmem:[%s963 + $0x30] sm:$0x3]
    %v972 = vsel %vm77, %v970, 0
    %974 = vmatprep.subr.mxu0 0.0
    %975 = vmatpush1.msra.mxu0 %v964
    %976 = vmatprep.subr.mxu0 0.0
    %977 = vmatpush1.msra.mxu0 %v965
    %978 = vmatprep.subr.mxu0 0.0
    %979 = vmatpush1.msra.mxu0 %v966
    %980 = vmatprep.subr.mxu0 0.0
    %981 = vmatpush1.msra.mxu0 %v967
    %982 = vmatprep.subr.mxu0 0.0
    %983 = vmatpush1.msra.mxu0 %v968
    %984 = vmatprep.subr.mxu0 0.0
    %985 = vmatpush1.msra.mxu0 %v969
    %986 = vmatprep.subr.mxu0 0.0
    %987 = vmatpush1.msra.mxu0 %v972
    %988 = vmatprep.subr.mxu0 0.0
    %989 = vmatpush1.msra.mxu0 0.0
    %990 = vmatprep.subr.mxu0 0.0
    %991 = vmatpush1.msra.mxu0 0.0
    %992 = vmatprep.subr.mxu0 0.0
    %993 = vmatpush1.msra.mxu0 0.0
    %994 = vmatprep.subr.mxu0 0.0
    %995 = vmatpush1.msra.mxu0 0.0
    %996 = vmatprep.subr.mxu0 0.0
    %997 = vmatpush1.msra.mxu0 0.0
    %998 = vmatprep.subr.mxu0 0.0
    %999 = vmatpush1.msra.mxu0 0.0
    %1000 = vmatprep.subr.mxu0 0.0
    %1001 = vmatpush1.msra.mxu0 0.0
    %1002 = vmatprep.subr.mxu0 0.0
    %1003 = vmatpush1.msra.mxu0 0.0
    %1004 = vmatprep.subr.mxu0 0.0
    %1005 = vmatpush1.msra.mxu0 0.0
    %1006 = vmatprep.subr.mxu0 0.0
    %1007 = vmatpush1.msra.mxu0 0.0
    %1008 = vmatprep.subr.mxu0 0.0
    %1009 = vmatpush1.msra.mxu0 0.0
    %1010 = vmatprep.subr.mxu0 0.0
    %1011 = vmatpush1.msra.mxu0 0.0
    %1012 = vmatprep.subr.mxu0 0.0
    %1013 = vmatpush1.msra.mxu0 0.0
    %1014 = vmatprep.subr.mxu0 0.0
    %1015 = vmatpush1.msra.mxu0 0.0
    %1016 = vmatprep.subr.mxu0 0.0
    %1017 = vmatpush1.msra.mxu0 0.0
    %1018 = vmatprep.subr.mxu0 0.0
    %1019 = vmatpush1.msra.mxu0 0.0
    %1020 = vmatprep.subr.mxu0 0.0
    %1021 = vmatpush1.msra.mxu0 0.0
    %1022 = vmatprep.subr.mxu0 0.0
    %1023 = vmatpush1.msra.mxu0 0.0
    %1024 = vmatprep.subr.mxu0 0.0
    %1025 = vmatpush1.msra.mxu0 0.0
    %1026 = vmatprep.subr.mxu0 0.0
    %1027 = vmatpush1.msra.mxu0 0.0
    %1028 = vmatprep.subr.mxu0 0.0
    %1029 = vmatpush1.msra.mxu0 0.0
    %1030 = vmatprep.subr.mxu0 0.0
    %1031 = vmatpush1.msra.mxu0 0.0
    %1032 = vmatprep.subr.mxu0 0.0
    %1033 = vmatpush1.msra.mxu0 0.0
    %1034 = vmatprep.subr.mxu0 0.0
    %1035 = vmatpush1.msra.mxu0 0.0
    %1036 = vmatprep.subr.mxu0 0.0
    %1037 = vmatpush1.msra.mxu0 0.0
    %1038 = vmatprep.mubr.f32.mxu0 0.0
    %1039 = vmatmul.mubr.f32.gmra.mrb[0].mxu0 %v42
    %v1040 = vpop.f32.mrb[0].mxu0
    %v1041 = vadd.f32 0.0, %v1040
    %v1042 = vpop.f32.mrb[0].mxu0
    %1043 = vmatprep.mubr.f32.mxu0 0.0
    %1044 = vmatmul.mubr.f32.gmra.mrb[0].mxu0 %v45
    %v1045 = vpop.f32.mrb[0].mxu0
    %v1046 = vadd.f32 0.0, %v1045
    %v1047 = vpop.f32.mrb[0].mxu0
    %1048 = vmatprep.mubr.f32.mxu0 0.0
    %1049 = vmatmul.mubr.f32.gmra.mrb[0].mxu0 %v48
    %v1050 = vpop.f32.mrb[0].mxu0
    %v1051 = vadd.f32 0.0, %v1050
    %v1052 = vpop.f32.mrb[0].mxu0
    %1053 = vmatprep.mubr.f32.mxu0 0.0
    %1054 = vmatmul.mubr.f32.gmra.mrb[0].mxu0 %v51
    %v1055 = vpop.f32.mrb[0].mxu0
    %v1056 = vadd.f32 0.0, %v1055
    %v1057 = vpop.f32.mrb[0].mxu0
    %1058 = vmatprep.mubr.f32.mxu0 0.0
    %1059 = vmatmul.mubr.f32.gmra.mrb[0].mxu0 %v54
    %v1060 = vpop.f32.mrb[0].mxu0
    %v1061 = vadd.f32 0.0, %v1060
    %v1062 = vpop.f32.mrb[0].mxu0
    %1063 = vmatprep.mubr.f32.mxu0 0.0
    %1064 = vmatmul.mubr.f32.gmra.mrb[0].mxu0 %v57
    %v1065 = vpop.f32.mrb[0].mxu0
    %v1066 = vadd.f32 0.0, %v1065
    %v1067 = vpop.f32.mrb[0].mxu0
    %1068 = vmatprep.mubr.f32.mxu0 0.0
    %1069 = vmatmul.mubr.f32.gmra.mrb[0].mxu0 %v60
    %v1070 = vpop.f32.mrb[0].mxu0
    %v1071 = vadd.f32 0.0, %v1070
    %v1072 = vpop.f32.mrb[0].mxu0
    %1073 = vmatprep.mubr.f32.mxu0 0.0
    %1074 = vmatmul.mubr.f32.gmra.mrb[0].mxu0 %v63
    %v1075 = vpop.f32.mrb[0].mxu0
    %v1076 = vadd.f32 0.0, %v1075
    %v1077 = vpop.f32.mrb[0].mxu0
    %1078 = vmatprep.mubr.f32.mxu0 0.0
    %1079 = vmatmul.mubr.f32.gmra.mrb[0].mxu0 %v66
    %v1080 = vpop.f32.mrb[0].mxu0
    %v1081 = vadd.f32 0.0, %v1080
    %v1082 = vpop.f32.mrb[0].mxu0
    %1083 = vmatprep.mubr.f32.mxu0 0.0
    %1084 = vmatmul.mubr.f32.gmra.mrb[0].mxu0 %v69
    %v1085 = vpop.f32.mrb[0].mxu0
    %v1086 = vadd.f32 0.0, %v1085
    %v1087 = vpop.f32.mrb[0].mxu0
    %1088 = vmatprep.mubr.f32.mxu0 0.0
    %1089 = vmatmul.mubr.f32.gmra.mrb[0].mxu0 %v72
    %v1090 = vpop.f32.mrb[0].mxu0
    %v1091 = vadd.f32 0.0, %v1090
    %v1092 = vpop.f32.mrb[0].mxu0
    %1093 = vmatprep.mubr.f32.mxu0 0.0
    %1094 = vmatmul.mubr.f32.gmra.mrb[0].mxu0 %v75
    %v1095 = vpop.f32.mrb[0].mxu0
    %v1096 = vadd.f32 0.0, %v1095
    %v1097 = vpop.f32.mrb[0].mxu0
    %1098 = vdwg.mxu0
    %s1099 = scalar_lea.vmem [#allocation2], 576
    %1100 = vst [vmem:[%s1099] sm:$0xff] %v1041
    %1101 = vst [vmem:[%s1099 + $0x8] sm:$0xff] %v1046
    %1102 = vst [vmem:[%s1099 + $0x10] sm:$0xff] %v1051
    %1103 = vst [vmem:[%s1099 + $0x18] sm:$0xff] %v1056
    %1104 = vst [vmem:[%s1099 + $0x20] sm:$0xff] %v1061
    %1105 = vst [vmem:[%s1099 + $0x28] sm:$0xff] %v1066
    %1106 = vst [vmem:[%s1099 + $0x30] sm:$0xff] %v1071
    %1107 = vst [vmem:[%s1099 + $0x38] sm:$0xff] %v1076
    %1108 = vst [vmem:[%s1099 + $0x40] sm:$0xff] %v1081
    %1109 = vst [vmem:[%s1099 + $0x48] sm:$0xff] %v1086
    %1110 = vst [vmem:[%s1099 + $0x50] sm:$0xff] %v1091
    %1111 = vst [vmem:[%s1099 + $0x58] sm:$0xff] %v1096
    %s1112 = scalar_lea.vmem %s0, 392
    %v1113 = vld [vmem:[%s1112] sm:$0xff]
    %v1114 = vld [vmem:[%s1112 + $0x8] sm:$0xff]
    %v1115 = vld [vmem:[%s1112 + $0x10] sm:$0xff]
    %v1116 = vld [vmem:[%s1112 + $0x18] sm:$0xff]
    %v1117 = vld [vmem:[%s1112 + $0x20] sm:$0xff]
    %v1118 = vld [vmem:[%s1112 + $0x28] sm:$0xff]
    %v1119 = vld [vmem:[%s1112 + $0x30] sm:$0x3]
    %v1121 = vsel %vm77, %v1119, 0
    %1123 = vmatprep.subr.mxu0 0.0
    %1124 = vmatpush1.msra.mxu0 %v1113
    %1125 = vmatprep.subr.mxu0 0.0
    %1126 = vmatpush1.msra.mxu0 %v1114
    %1127 = vmatprep.subr.mxu0 0.0
    %1128 = vmatpush1.msra.mxu0 %v1115
    %1129 = vmatprep.subr.mxu0 0.0
    %1130 = vmatpush1.msra.mxu0 %v1116
    %1131 = vmatprep.subr.mxu0 0.0
    %1132 = vmatpush1.msra.mxu0 %v1117
    %1133 = vmatprep.subr.mxu0 0.0
    %1134 = vmatpush1.msra.mxu0 %v1118
    %1135 = vmatprep.subr.mxu0 0.0
    %1136 = vmatpush1.msra.mxu0 %v1121
    %1137 = vmatprep.subr.mxu0 0.0
    %1138 = vmatpush1.msra.mxu0 0.0
    %1139 = vmatprep.subr.mxu0 0.0
    %1140 = vmatpush1.msra.mxu0 0.0
    %1141 = vmatprep.subr.mxu0 0.0
    %1142 = vmatpush1.msra.mxu0 0.0
    %1143 = vmatprep.subr.mxu0 0.0
    %1144 = vmatpush1.msra.mxu0 0.0
    %1145 = vmatprep.subr.mxu0 0.0
    %1146 = vmatpush1.msra.mxu0 0.0
    %1147 = vmatprep.subr.mxu0 0.0
    %1148 = vmatpush1.msra.mxu0 0.0
    %1149 = vmatprep.subr.mxu0 0.0
    %1150 = vmatpush1.msra.mxu0 0.0
    %1151 = vmatprep.subr.mxu0 0.0
    %1152 = vmatpush1.msra.mxu0 0.0
    %1153 = vmatprep.subr.mxu0 0.0
    %1154 = vmatpush1.msra.mxu0 0.0
    %1155 = vmatprep.subr.mxu0 0.0
    %1156 = vmatpush1.msra.mxu0 0.0
    %1157 = vmatprep.subr.mxu0 0.0
    %1158 = vmatpush1.msra.mxu0 0.0
    %1159 = vmatprep.subr.mxu0 0.0
    %1160 = vmatpush1.msra.mxu0 0.0
    %1161 = vmatprep.subr.mxu0 0.0
    %1162 = vmatpush1.msra.mxu0 0.0
    %1163 = vmatprep.subr.mxu0 0.0
    %1164 = vmatpush1.msra.mxu0 0.0
    %1165 = vmatprep.subr.mxu0 0.0
    %1166 = vmatpush1.msra.mxu0 0.0
    %1167 = vmatprep.subr.mxu0 0.0
    %1168 = vmatpush1.msra.mxu0 0.0
    %1169 = vmatprep.subr.mxu0 0.0
    %1170 = vmatpush1.msra.mxu0 0.0
    %1171 = vmatprep.subr.mxu0 0.0
    %1172 = vmatpush1.msra.mxu0 0.0
    %1173 = vmatprep.subr.mxu0 0.0
    %1174 = vmatpush1.msra.mxu0 0.0
    %1175 = vmatprep.subr.mxu0 0.0
    %1176 = vmatpush1.msra.mxu0 0.0
    %1177 = vmatprep.subr.mxu0 0.0
    %1178 = vmatpush1.msra.mxu0 0.0
    %1179 = vmatprep.subr.mxu0 0.0
    %1180 = vmatpush1.msra.mxu0 0.0
    %1181 = vmatprep.subr.mxu0 0.0
    %1182 = vmatpush1.msra.mxu0 0.0
    %1183 = vmatprep.subr.mxu0 0.0
    %1184 = vmatpush1.msra.mxu0 0.0
    %1185 = vmatprep.subr.mxu0 0.0
    %1186 = vmatpush1.msra.mxu0 0.0
    %1187 = vmatprep.mubr.f32.mxu0 0.0
    %1188 = vmatmul.mubr.f32.gmra.mrb[0].mxu0 %v42
    %v1189 = vpop.f32.mrb[0].mxu0
    %v1190 = vadd.f32 0.0, %v1189
    %v1191 = vpop.f32.mrb[0].mxu0
    %1192 = vmatprep.mubr.f32.mxu0 0.0
    %1193 = vmatmul.mubr.f32.gmra.mrb[0].mxu0 %v45
    %v1194 = vpop.f32.mrb[0].mxu0
    %v1195 = vadd.f32 0.0, %v1194
    %v1196 = vpop.f32.mrb[0].mxu0
    %1197 = vmatprep.mubr.f32.mxu0 0.0
    %1198 = vmatmul.mubr.f32.gmra.mrb[0].mxu0 %v48
    %v1199 = vpop.f32.mrb[0].mxu0
    %v1200 = vadd.f32 0.0, %v1199
    %v1201 = vpop.f32.mrb[0].mxu0
    %1202 = vmatprep.mubr.f32.mxu0 0.0
    %1203 = vmatmul.mubr.f32.gmra.mrb[0].mxu0 %v51
    %v1204 = vpop.f32.mrb[0].mxu0
    %v1205 = vadd.f32 0.0, %v1204
    %v1206 = vpop.f32.mrb[0].mxu0
    %1207 = vmatprep.mubr.f32.mxu0 0.0
    %1208 = vmatmul.mubr.f32.gmra.mrb[0].mxu0 %v54
    %v1209 = vpop.f32.mrb[0].mxu0
    %v1210 = vadd.f32 0.0, %v1209
    %v1211 = vpop.f32.mrb[0].mxu0
    %1212 = vmatprep.mubr.f32.mxu0 0.0
    %1213 = vmatmul.mubr.f32.gmra.mrb[0].mxu0 %v57
    %v1214 = vpop.f32.mrb[0].mxu0
    %v1215 = vadd.f32 0.0, %v1214
    %v1216 = vpop.f32.mrb[0].mxu0
    %1217 = vmatprep.mubr.f32.mxu0 0.0
    %1218 = vmatmul.mubr.f32.gmra.mrb[0].mxu0 %v60
    %v1219 = vpop.f32.mrb[0].mxu0
    %v1220 = vadd.f32 0.0, %v1219
    %v1221 = vpop.f32.mrb[0].mxu0
    %1222 = vmatprep.mubr.f32.mxu0 0.0
    %1223 = vmatmul.mubr.f32.gmra.mrb[0].mxu0 %v63
    %v1224 = vpop.f32.mrb[0].mxu0
    %v1225 = vadd.f32 0.0, %v1224
    %v1226 = vpop.f32.mrb[0].mxu0
    %1227 = vmatprep.mubr.f32.mxu0 0.0
    %1228 = vmatmul.mubr.f32.gmra.mrb[0].mxu0 %v66
    %v1229 = vpop.f32.mrb[0].mxu0
    %v1230 = vadd.f32 0.0, %v1229
    %v1231 = vpop.f32.mrb[0].mxu0
    %1232 = vmatprep.mubr.f32.mxu0 0.0
    %1233 = vmatmul.mubr.f32.gmra.mrb[0].mxu0 %v69
    %v1234 = vpop.f32.mrb[0].mxu0
    %v1235 = vadd.f32 0.0, %v1234
    %v1236 = vpop.f32.mrb[0].mxu0
    %1237 = vmatprep.mubr.f32.mxu0 0.0
    %1238 = vmatmul.mubr.f32.gmra.mrb[0].mxu0 %v72
    %v1239 = vpop.f32.mrb[0].mxu0
    %v1240 = vadd.f32 0.0, %v1239
    %v1241 = vpop.f32.mrb[0].mxu0
    %1242 = vmatprep.mubr.f32.mxu0 0.0
    %1243 = vmatmul.mubr.f32.gmra.mrb[0].mxu0 %v75
    %v1244 = vpop.f32.mrb[0].mxu0
    %v1245 = vadd.f32 0.0, %v1244
    %v1246 = vpop.f32.mrb[0].mxu0
    %1247 = vdwg.mxu0
    %s1248 = scalar_lea.vmem [#allocation2], 672
    %1249 = vst [vmem:[%s1248] sm:$0xff] %v1190
    %1250 = vst [vmem:[%s1248 + $0x8] sm:$0xff] %v1195
    %1251 = vst [vmem:[%s1248 + $0x10] sm:$0xff] %v1200
    %1252 = vst [vmem:[%s1248 + $0x18] sm:$0xff] %v1205
    %1253 = vst [vmem:[%s1248 + $0x20] sm:$0xff] %v1210
    %1254 = vst [vmem:[%s1248 + $0x28] sm:$0xff] %v1215
    %1255 = vst [vmem:[%s1248 + $0x30] sm:$0xff] %v1220
    %1256 = vst [vmem:[%s1248 + $0x38] sm:$0xff] %v1225
    %1257 = vst [vmem:[%s1248 + $0x40] sm:$0xff] %v1230
    %1258 = vst [vmem:[%s1248 + $0x48] sm:$0xff] %v1235
    %1259 = vst [vmem:[%s1248 + $0x50] sm:$0xff] %v1240
    %1260 = vst [vmem:[%s1248 + $0x58] sm:$0xff] %v1245
    %v1261 = vld [vmem:[%s2] sm:$0xff]
    %1263 = vset.pattern.permute.xlu0 0
    %1264 = vperm.xlu0 %1263, %v1261
    %v1265 = vpop.permute.xlu0 %1264
    %v1267 = vld [vmem:[#allocation2 + $0x10] sm:$0xff]
    %v1268 = vadd.f32 %v1265, %v1267
    %v1269 = vmax.f32 %v1268, 0.0
    %v1270 = vld [vmem:[#allocation2 + $0x8] sm:$0xff]
    %v1271 = vadd.f32 %v1265, %v1270
    %v1272 = vld [vmem:[%s354 + $0x10] sm:$0xff]
    %v1273 = vadd.f32 %v1271, %v1272
    %v1274 = vmax.f32 %v1273, 0.0
    %v1275 = vmax.f32 %v1269, %v1274
    %v1276 = vld [vmem:[#allocation2] sm:$0xff]
    %v1277 = vadd.f32 %v1265, %v1276
    %v1278 = vld [vmem:[%s354 + $0x8] sm:$0xff]
    %v1279 = vadd.f32 %v1277, %v1278
    %v1280 = vld [vmem:[%s503 + $0x10] sm:$0xff]
    %v1281 = vadd.f32 %v1279, %v1280
    %v1282 = vmax.f32 %v1281, 0.0
    %v1283 = vmax.f32 %v1275, %v1282
    %v1284 = vld [vmem:[%s354] sm:$0xff]
    %v1285 = vadd.f32 %v1265, %v1284
    %v1286 = vld [vmem:[%s503 + $0x8] sm:$0xff]
    %v1287 = vadd.f32 %v1285, %v1286
    %v1288 = vld [vmem:[%s652 + $0x10] sm:$0xff]
    %v1289 = vadd.f32 %v1287, %v1288
    %v1290 = vmax.f32 %v1289, 0.0
    %v1291 = vmax.f32 %v1283, %v1290
    %v1292 = vld [vmem:[%s503] sm:$0xff]
    %v1293 = vadd.f32 %v1265, %v1292
    %v1294 = vld [vmem:[%s652 + $0x8] sm:$0xff]
    %v1295 = vadd.f32 %v1293, %v1294
    %v1296 = vld [vmem:[%s801 + $0x10] sm:$0xff]
    %v1297 = vadd.f32 %v1295, %v1296
    %v1298 = vmax.f32 %v1297, 0.0
    %v1299 = vmax.f32 %v1291, %v1298
    %v1300 = vld [vmem:[%s652] sm:$0xff]
    %v1301 = vadd.f32 %v1265, %v1300
    %v1302 = vld [vmem:[%s801 + $0x8] sm:$0xff]
    %v1303 = vadd.f32 %v1301, %v1302
    %v1304 = vld [vmem:[%s950 + $0x10] sm:$0xff]
    %v1305 = vadd.f32 %v1303, %v1304
    %v1306 = vmax.f32 %v1305, 0.0
    %v1307 = vmax.f32 %v1299, %v1306
    %v1308 = vld [vmem:[%s801] sm:$0xff]
    %v1309 = vadd.f32 %v1265, %v1308
    %v1310 = vld [vmem:[%s950 + $0x8] sm:$0xff]
    %v1311 = vadd.f32 %v1309, %v1310
    %v1312 = vld [vmem:[%s1099 + $0x10] sm:$0xff]
    %v1313 = vadd.f32 %v1311, %v1312
    %v1314 = vmax.f32 %v1313, 0.0
    %v1315 = vmax.f32 %v1307, %v1314
    %v1316 = vld [vmem:[%s950] sm:$0xff]
    %v1317 = vadd.f32 %v1265, %v1316
    %v1318 = vld [vmem:[%s1099 + $0x8] sm:$0xff]
    %v1319 = vadd.f32 %v1317, %v1318
    %v1320 = vld [vmem:[%s1248 + $0x10] sm:$0xff]
    %v1321 = vadd.f32 %v1319, %v1320
    %v1322 = vmax.f32 %v1321, 0.0
    %v1323 = vmax.f32 %v1315, %v1322
    %v1324 = vld [vmem:[%s1099] sm:$0xff]
    %v1325 = vadd.f32 %v1265, %v1324
    %v1326 = vld [vmem:[%s1248 + $0x8] sm:$0xff]
    %v1327 = vadd.f32 %v1325, %v1326
    %v1328 = vmax.f32 %v1327, 0.0
    %v1329 = vmax.f32 %v1323, %v1328
    %v1330 = vld [vmem:[%s1248] sm:$0xff]
    %v1331 = vadd.f32 %v1265, %v1330
    %v1332 = vmax.f32 %v1331, 0.0
    %v1333 = vmax.f32 %v1329, %v1332
    %v1334 = vld [vmem:[%s2 + $0x8] sm:$0xff]
    %1336 = vset.pattern.permute.xlu0 0
    %1337 = vperm.xlu0 %1336, %v1334
    %v1338 = vpop.permute.xlu0 %1337
    %v1340 = vld [vmem:[#allocation2 + $0x28] sm:$0xff]
    %v1341 = vadd.f32 %v1338, %v1340
    %v1342 = vld [vmem:[%s354 + $0x30] sm:$0xff]
    %v1343 = vadd.f32 %v1341, %v1342
    %v1344 = vmax.f32 %v1343, 0.0
    %v1345 = vld [vmem:[#allocation2 + $0x20] sm:$0xff]
    %v1346 = vadd.f32 %v1338, %v1345
    %v1347 = vld [vmem:[%s354 + $0x28] sm:$0xff]
    %v1348 = vadd.f32 %v1346, %v1347
    %v1349 = vld [vmem:[%s503 + $0x30] sm:$0xff]
    %v1350 = vadd.f32 %v1348, %v1349
    %v1351 = vmax.f32 %v1350, 0.0
    %v1352 = vmax.f32 %v1344, %v1351
    %v1353 = vld [vmem:[#allocation2 + $0x18] sm:$0xff]
    %v1354 = vadd.f32 %v1338, %v1353
    %v1355 = vld [vmem:[%s354 + $0x20] sm:$0xff]
    %v1356 = vadd.f32 %v1354, %v1355
    %v1357 = vld [vmem:[%s503 + $0x28] sm:$0xff]
    %v1358 = vadd.f32 %v1356, %v1357
    %v1359 = vld [vmem:[%s652 + $0x30] sm:$0xff]
    %v1360 = vadd.f32 %v1358, %v1359
    %v1361 = vmax.f32 %v1360, 0.0
    %v1362 = vmax.f32 %v1352, %v1361
    %v1363 = vld [vmem:[%s354 + $0x18] sm:$0xff]
    %v1364 = vadd.f32 %v1338, %v1363
    %v1365 = vld [vmem:[%s503 + $0x20] sm:$0xff]
    %v1366 = vadd.f32 %v1364, %v1365
    %v1367 = vld [vmem:[%s652 + $0x28] sm:$0xff]
    %v1368 = vadd.f32 %v1366, %v1367
    %v1369 = vld [vmem:[%s801 + $0x30] sm:$0xff]
    %v1370 = vadd.f32 %v1368, %v1369
    %v1371 = vmax.f32 %v1370, 0.0
    %v1372 = vmax.f32 %v1362, %v1371
    %v1373 = vld [vmem:[%s503 + $0x18] sm:$0xff]
    %v1374 = vadd.f32 %v1338, %v1373
    %v1375 = vld [vmem:[%s652 + $0x20] sm:$0xff]
    %v1376 = vadd.f32 %v1374, %v1375
    %v1377 = vld [vmem:[%s801 + $0x28] sm:$0xff]
    %v1378 = vadd.f32 %v1376, %v1377
    %v1379 = vld [vmem:[%s950 + $0x30] sm:$0xff]
    %v1380 = vadd.f32 %v1378, %v1379
    %v1381 = vmax.f32 %v1380, 0.0
    %v1382 = vmax.f32 %v1372, %v1381
    %v1383 = vld [vmem:[%s652 + $0x18] sm:$0xff]
    %v1384 = vadd.f32 %v1338, %v1383
    %v1385 = vld [vmem:[%s801 + $0x20] sm:$0xff]
    %v1386 = vadd.f32 %v1384, %v1385
    %v1387 = vld [vmem:[%s950 + $0x28] sm:$0xff]
    %v1388 = vadd.f32 %v1386, %v1387
    %v1389 = vld [vmem:[%s1099 + $0x30] sm:$0xff]
    %v1390 = vadd.f32 %v1388, %v1389
    %v1391 = vmax.f32 %v1390, 0.0
    %v1392 = vmax.f32 %v1382, %v1391
    %v1393 = vld [vmem:[%s801 + $0x18] sm:$0xff]
    %v1394 = vadd.f32 %v1338, %v1393
    %v1395 = vld [vmem:[%s950 + $0x20] sm:$0xff]
    %v1396 = vadd.f32 %v1394, %v1395
    %v1397 = vld [vmem:[%s1099 + $0x28] sm:$0xff]
    %v1398 = vadd.f32 %v1396, %v1397
    %v1399 = vld [vmem:[%s1248 + $0x30] sm:$0xff]
    %v1400 = vadd.f32 %v1398, %v1399
    %v1401 = vmax.f32 %v1400, 0.0
    %v1402 = vmax.f32 %v1392, %v1401
    %v1403 = vld [vmem:[%s950 + $0x18] sm:$0xff]
    %v1404 = vadd.f32 %v1338, %v1403
    %v1405 = vld [vmem:[%s1099 + $0x20] sm:$0xff]
    %v1406 = vadd.f32 %v1404, %v1405
    %v1407 = vld [vmem:[%s1248 + $0x28] sm:$0xff]
    %v1408 = vadd.f32 %v1406, %v1407
    %v1409 = vmax.f32 %v1408, 0.0
    %v1410 = vmax.f32 %v1402, %v1409
    %v1411 = vld [vmem:[%s1099 + $0x18] sm:$0xff]
    %v1412 = vadd.f32 %v1338, %v1411
    %v1413 = vld [vmem:[%s1248 + $0x20] sm:$0xff]
    %v1414 = vadd.f32 %v1412, %v1413
    %v1415 = vmax.f32 %v1414, 0.0
    %v1416 = vmax.f32 %v1410, %v1415
    %v1417 = vld [vmem:[%s2 + $0x10] sm:$0xff]
    %1419 = vset.pattern.permute.xlu0 0
    %1420 = vperm.xlu0 %1419, %v1417
    %v1421 = vpop.permute.xlu0 %1420
    %v1423 = vld [vmem:[#allocation2 + $0x48] sm:$0xff]
    %v1424 = vadd.f32 %v1421, %v1423
    %v1425 = vld [vmem:[%s354 + $0x50] sm:$0xff]
    %v1426 = vadd.f32 %v1424, %v1425
    %v1427 = vld [vmem:[%s503 + $0x58] sm:$0xff]
    %v1428 = vadd.f32 %v1426, %v1427
    %v1429 = vmax.f32 %v1428, 0.0
    %v1430 = vld [vmem:[#allocation2 + $0x40] sm:$0xff]
    %v1431 = vadd.f32 %v1421, %v1430
    %v1432 = vld [vmem:[%s354 + $0x48] sm:$0xff]
    %v1433 = vadd.f32 %v1431, %v1432
    %v1434 = vld [vmem:[%s503 + $0x50] sm:$0xff]
    %v1435 = vadd.f32 %v1433, %v1434
    %v1436 = vld [vmem:[%s652 + $0x58] sm:$0xff]
    %v1437 = vadd.f32 %v1435, %v1436
    %v1438 = vmax.f32 %v1437, 0.0
    %v1439 = vmax.f32 %v1429, %v1438
    %v1440 = vld [vmem:[#allocation2 + $0x38] sm:$0xff]
    %v1441 = vadd.f32 %v1421, %v1440
    %v1442 = vld [vmem:[%s354 + $0x40] sm:$0xff]
    %v1443 = vadd.f32 %v1441, %v1442
    %v1444 = vld [vmem:[%s503 + $0x48] sm:$0xff]
    %v1445 = vadd.f32 %v1443, %v1444
    %v1446 = vld [vmem:[%s652 + $0x50] sm:$0xff]
    %v1447 = vadd.f32 %v1445, %v1446
    %v1448 = vld [vmem:[%s801 + $0x58] sm:$0xff]
    %v1449 = vadd.f32 %v1447, %v1448
    %v1450 = vmax.f32 %v1449, 0.0
    %v1451 = vmax.f32 %v1439, %v1450
    %v1452 = vld [vmem:[%s354 + $0x38] sm:$0xff]
    %v1453 = vadd.f32 %v1421, %v1452
    %v1454 = vld [vmem:[%s503 + $0x40] sm:$0xff]
    %v1455 = vadd.f32 %v1453, %v1454
    %v1456 = vld [vmem:[%s652 + $0x48] sm:$0xff]
    %v1457 = vadd.f32 %v1455, %v1456
    %v1458 = vld [vmem:[%s801 + $0x50] sm:$0xff]
    %v1459 = vadd.f32 %v1457, %v1458
    %v1460 = vld [vmem:[%s950 + $0x58] sm:$0xff]
    %v1461 = vadd.f32 %v1459, %v1460
    %v1462 = vmax.f32 %v1461, 0.0
    %v1463 = vmax.f32 %v1451, %v1462
    %v1464 = vld [vmem:[%s503 + $0x38] sm:$0xff]
    %v1465 = vadd.f32 %v1421, %v1464
    %v1466 = vld [vmem:[%s652 + $0x40] sm:$0xff]
    %v1467 = vadd.f32 %v1465, %v1466
    %v1468 = vld [vmem:[%s801 + $0x48] sm:$0xff]
    %v1469 = vadd.f32 %v1467, %v1468
    %v1470 = vld [vmem:[%s950 + $0x50] sm:$0xff]
    %v1471 = vadd.f32 %v1469, %v1470
    %v1472 = vld [vmem:[%s1099 + $0x58] sm:$0xff]
    %v1473 = vadd.f32 %v1471, %v1472
    %v1474 = vmax.f32 %v1473, 0.0
    %v1475 = vmax.f32 %v1463, %v1474
    %v1476 = vld [vmem:[%s652 + $0x38] sm:$0xff]
    %v1477 = vadd.f32 %v1421, %v1476
    %v1478 = vld [vmem:[%s801 + $0x40] sm:$0xff]
    %v1479 = vadd.f32 %v1477, %v1478
    %v1480 = vld [vmem:[%s950 + $0x48] sm:$0xff]
    %v1481 = vadd.f32 %v1479, %v1480
    %v1482 = vld [vmem:[%s1099 + $0x50] sm:$0xff]
    %v1483 = vadd.f32 %v1481, %v1482
    %v1484 = vld [vmem:[%s1248 + $0x58] sm:$0xff]
    %v1485 = vadd.f32 %v1483, %v1484
    %v1486 = vmax.f32 %v1485, 0.0
    %v1487 = vmax.f32 %v1475, %v1486
    %v1488 = vld [vmem:[%s801 + $0x38] sm:$0xff]
    %v1489 = vadd.f32 %v1421, %v1488
    %v1490 = vld [vmem:[%s950 + $0x40] sm:$0xff]
    %v1491 = vadd.f32 %v1489, %v1490
    %v1492 = vld [vmem:[%s1099 + $0x48] sm:$0xff]
    %v1493 = vadd.f32 %v1491, %v1492
    %v1494 = vld [vmem:[%s1248 + $0x50] sm:$0xff]
    %v1495 = vadd.f32 %v1493, %v1494
    %v1496 = vmax.f32 %v1495, 0.0
    %v1497 = vmax.f32 %v1487, %v1496
    %v1498 = vld [vmem:[%s950 + $0x38] sm:$0xff]
    %v1499 = vadd.f32 %v1421, %v1498
    %v1500 = vld [vmem:[%s1099 + $0x40] sm:$0xff]
    %v1501 = vadd.f32 %v1499, %v1500
    %v1502 = vld [vmem:[%s1248 + $0x48] sm:$0xff]
    %v1503 = vadd.f32 %v1501, %v1502
    %v1504 = vmax.f32 %v1503, 0.0
    %v1505 = vmax.f32 %v1497, %v1504
    %v1506 = vld [vmem:[%s3] sm:$0x3]
    %v1507 = vld [vmem:[%s4] sm:$0x3]
    %1509 = vset.pattern.permute.xlu0 0
    %1510 = vperm.xlu0 %1509, %v1507
    %v1511 = vpop.permute.xlu0 %1510
    %vm1513 = vcmask 195584
    %v1515 = vsel %vm1513, %v1506, 0
    %1517 = vmatprep.subr.mxu0 0.0
    %1518 = vmatpush1.msra.mxu0 %v1333
    %1519 = vmatprep.subr.mxu0 0.0
    %1520 = vmatpush1.msra.mxu0 %v1416
    %1521 = vmatprep.subr.mxu0 0.0
    %1522 = vmatpush1.msra.mxu0 %v1505
    %1523 = vmatprep.subr.mxu0 0.0
    %1524 = vmatpush1.msra.mxu0 0.0
    %1525 = vmatprep.subr.mxu0 0.0
    %1526 = vmatpush1.msra.mxu0 0.0
    %1527 = vmatprep.subr.mxu0 0.0
    %1528 = vmatpush1.msra.mxu0 0.0
    %1529 = vmatprep.subr.mxu0 0.0
    %1530 = vmatpush1.msra.mxu0 0.0
    %1531 = vmatprep.subr.mxu0 0.0
    %1532 = vmatpush1.msra.mxu0 0.0
    %1533 = vmatprep.subr.mxu0 0.0
    %1534 = vmatpush1.msra.mxu0 0.0
    %1535 = vmatprep.subr.mxu0 0.0
    %1536 = vmatpush1.msra.mxu0 0.0
    %1537 = vmatprep.subr.mxu0 0.0
    %1538 = vmatpush1.msra.mxu0 0.0
    %1539 = vmatprep.subr.mxu0 0.0
    %1540 = vmatpush1.msra.mxu0 0.0
    %1541 = vmatprep.subr.mxu0 0.0
    %1542 = vmatpush1.msra.mxu0 0.0
    %1543 = vmatprep.subr.mxu0 0.0
    %1544 = vmatpush1.msra.mxu0 0.0
    %1545 = vmatprep.subr.mxu0 0.0
    %1546 = vmatpush1.msra.mxu0 0.0
    %1547 = vmatprep.subr.mxu0 0.0
    %1548 = vmatpush1.msra.mxu0 0.0
    %1549 = vmatprep.subr.mxu0 0.0
    %1550 = vmatpush1.msra.mxu0 0.0
    %1551 = vmatprep.subr.mxu0 0.0
    %1552 = vmatpush1.msra.mxu0 0.0
    %1553 = vmatprep.subr.mxu0 0.0
    %1554 = vmatpush1.msra.mxu0 0.0
    %1555 = vmatprep.subr.mxu0 0.0
    %1556 = vmatpush1.msra.mxu0 0.0
    %1557 = vmatprep.subr.mxu0 0.0
    %1558 = vmatpush1.msra.mxu0 0.0
    %1559 = vmatprep.subr.mxu0 0.0
    %1560 = vmatpush1.msra.mxu0 0.0
    %1561 = vmatprep.subr.mxu0 0.0
    %1562 = vmatpush1.msra.mxu0 0.0
    %1563 = vmatprep.subr.mxu0 0.0
    %1564 = vmatpush1.msra.mxu0 0.0
    %1565 = vmatprep.subr.mxu0 0.0
    %1566 = vmatpush1.msra.mxu0 0.0
    %1567 = vmatprep.subr.mxu0 0.0
    %1568 = vmatpush1.msra.mxu0 0.0
    %1569 = vmatprep.subr.mxu0 0.0
    %1570 = vmatpush1.msra.mxu0 0.0
    %1571 = vmatprep.subr.mxu0 0.0
    %1572 = vmatpush1.msra.mxu0 0.0
    %1573 = vmatprep.subr.mxu0 0.0
    %1574 = vmatpush1.msra.mxu0 0.0
    %1575 = vmatprep.subr.mxu0 0.0
    %1576 = vmatpush1.msra.mxu0 0.0
    %1577 = vmatprep.subr.mxu0 0.0
    %1578 = vmatpush1.msra.mxu0 0.0
    %1579 = vmatprep.subr.mxu0 0.0
    %1580 = vmatpush1.msra.mxu0 0.0
    %1581 = vmatprep.mubr.f32.mxu0 0.0
    %1582 = vmatmul.mubr.f32.gmra.mrb[0].mxu0 %v1515
    %v1583 = vpop.f32.mrb[0].mxu0
    %v1584 = vadd.f32 %v1511, %v1583
    %v1585 = vpop.f32.mrb[0].mxu0
    %1586 = vdwg.mxu0
    %1587 = vst [vmem:[#allocation3] sm:$0x3] %v1584
    // Predicated region
    $region22: #{textcnn_forward.1} parent=1 // pred_check
      _
    $region23: #{textcnn_forward.1} parent=1 // pred_check_branch
      %1589 = sbr.rel (0) target = $region25
    $region24: #{textcnn_forward.1} parent=1 // pred_region
      %s1591 = ssub.s32 32, 32
      %1592 = vsyncadd [#allocation4], %s1591
      %s1594 = sshll.u32 [#allocation3], 4
      %s1595 = int_to_ptr.vmem [resolvable:$true] %s1594
      %1597 = dma.vmem_to_hbm [thread:$0]  %s1595, 32, %s5, [#allocation4]
    $region25: #{textcnn_forward.1} parent=1 // pred_fallthru
      _
    // Predicated region
    $region26: #{textcnn_forward.1} parent=1 // pred_check
      _
    $region27: #{textcnn_forward.1} parent=1 // pred_check_branch
      %1599 = sbr.rel (0) target = $region29
    $region28: #{textcnn_forward.1} parent=1 // pred_region
      %1600 = dma.done [#allocation4], 32
    $region29: #{textcnn_forward.1} parent=1 // pred_fallthru
      _
    %1601 = vsyncpa [#allocation4], 1

</llo_original>
